<compile_context>
chip_gen: v7x
topology: tpu7x:2x2x1
jax: 0.10.0
libtpu: 0.0.40
codegen_flags: <defaults>
</compile_context>

<pallas_src>
import functools

import jax
import jax.numpy as jnp
from jax.experimental import pallas as pl
from jax.experimental.pallas import tpu as pltpu


# ----------------------------------------------------------------------------
# Helpers
# ----------------------------------------------------------------------------
def _round_up(x, m):
    return (x + m - 1) // m * m


def _pick_time_chunk(T, max_chunk=4):
    """Largest divisor of T that is <= max_chunk.

    Kept small here so the demo exercises the cross-chunk h/c carry; raise
    max_chunk for long sequences to amortize per-grid-step overhead further.
    """
    tc = min(T, max_chunk)
    while T % tc:
        tc -= 1
    return tc


# ----------------------------------------------------------------------------
# Pallas kernel: one LSTM direction, one chunk of Tc timesteps per grid step.
# The input projection is already folded into `pre_ref` (x@W_ih^T + biases),
# so the serial loop only does h_prev @ W_hh^T plus the gate nonlinearities.
# h/c live in VMEM scratch and carry across grid steps.
# ----------------------------------------------------------------------------
def _lstm_chunk_kernel(pre_ref, whh_ref, y_ref, h_out_ref, c_out_ref,
                       h_sc, c_sc, *, reverse, time_chunk):
    chunk = pl.program_id(0)

    @pl.when(chunk == 0)
    def _init():
        h_sc[...] = jnp.zeros_like(h_sc)
        c_sc[...] = jnp.zeros_like(c_sc)

    Hp = h_sc.shape[1]
    w_hh = whh_ref[...]                  # (Hp, 4Hp) bf16, hoisted out of the loop

    def step(j, carry):
        del carry
        # In-chunk time index; backward direction walks the chunk in reverse
        # (the chunk order itself is reversed by the index_map).
        jj = (time_chunk - 1 - j) if reverse else j

        pre = pre_ref[jj]                # (Bp, 4Hp) f32, already x@W_ih + bias
        h_prev = h_sc[...]
        c_prev = c_sc[...]

        gates = pre + jnp.dot(h_prev.astype(jnp.bfloat16), w_hh,
                              preferred_element_type=jnp.float32)

        # 128-aligned gate slices (Hp is a multiple of 128); gate math in f32.
        i_g = jax.nn.sigmoid(gates[:, 0 * Hp:1 * Hp])
        f_g = jax.nn.sigmoid(gates[:, 1 * Hp:2 * Hp])
        g_g = jnp.tanh(gates[:, 2 * Hp:3 * Hp])
        o_g = jax.nn.sigmoid(gates[:, 3 * Hp:4 * Hp])

        c_new = f_g * c_prev + i_g * g_g
        h_new = o_g * jnp.tanh(c_new)

        c_sc[...] = c_new
        h_sc[...] = h_new
        y_ref[jj] = h_new.astype(y_ref.dtype)    # (Bp, Hp): lane-dense store
        return 0

    jax.lax.fori_loop(0, time_chunk, step, 0, unroll=True)

    # Final states: only the last grid step matters.
    @pl.when(chunk == pl.num_programs(0) - 1)
    def _final():
        h_out_ref[...] = h_sc[...]
        c_out_ref[...] = c_sc[...]


def _lstm_recurrence(pre_gates, w_hh_t, *, reverse, time_chunk):
    """One LSTM direction over a time-major pre-gate stream.

    pre_gates: (T, Bp, 4*Hp) f32   -- x @ W_ih^T + bias for every timestep
    w_hh_t:    (Hp, 4*Hp)    bf16  -- transposed, gate-padded recurrent weights
    returns    y (T, Bp, Hp) f32, h_final (Bp, Hp) f32, c_final (Bp, Hp) f32
    """
    T, Bp, G = pre_gates.shape
    Hp = w_hh_t.shape[0]
    assert G == 4 * Hp and T % time_chunk == 0
    assert Bp % 8 == 0 and Hp % 128 == 0
    n_chunks = T // time_chunk

    # Backward direction: walk the chunks in reverse via the index_map
    # (no flipped copies of x / y in HBM).
    if reverse:
        time_map = lambda c: (n_chunks - 1 - c, 0, 0)
    else:
        time_map = lambda c: (c, 0, 0)

    kernel = functools.partial(_lstm_chunk_kernel, reverse=reverse,
                               time_chunk=time_chunk)

    return pl.pallas_call(
        kernel,
        out_shape=(jax.ShapeDtypeStruct((T, Bp, Hp), jnp.float32),
                   jax.ShapeDtypeStruct((Bp, Hp), jnp.float32),
                   jax.ShapeDtypeStruct((Bp, Hp), jnp.float32)),
        grid_spec=pltpu.PrefetchScalarGridSpec(
            num_scalar_prefetch=0,
            grid=(n_chunks,),
            in_specs=[
                # pre-gate stream: one chunk of Tc timesteps per grid step
                pl.BlockSpec((time_chunk, Bp, 4 * Hp), time_map),
                # recurrent weights: constant block index -> fetched once and
                # kept resident.  (At production sizes also pass
                # pipeline_mode=pl.Buffered(1) to drop the second buffer.)
                pl.BlockSpec((Hp, 4 * Hp), lambda c: (0, 0)),
            ],
            out_specs=[
                pl.BlockSpec((time_chunk, Bp, Hp), time_map),
                pl.BlockSpec((Bp, Hp), lambda c: (0, 0)),     # final h
                pl.BlockSpec((Bp, Hp), lambda c: (0, 0)),     # final c
            ],
            scratch_shapes=[pltpu.VMEM((Bp, Hp), jnp.float32),   # h carry
                            pltpu.VMEM((Bp, Hp), jnp.float32)],  # c carry
        ),
        compiler_params=pltpu.CompilerParams(
            dimension_semantics=("arbitrary",)),     # sequential recurrence
    )(pre_gates, w_hh_t)


# ----------------------------------------------------------------------------
# Parameters.  Raw (torch-layout, f32) params drive the pure-JAX reference;
# `prepare_kernel_params` turns them into the padded / transposed / bf16
# layout the Pallas path consumes.
# ----------------------------------------------------------------------------
def init_encoder_params(key, tokens_num, emb_dim, hidden_size, num_layers):
    keys = jax.random.split(key, 1 + num_layers * 2 * 4)
    k_iter = iter(keys)

    embedding = jax.random.normal(next(k_iter), (tokens_num, emb_dim),
                                  dtype=jnp.float32)

    bound = float(hidden_size) ** -0.5
    layers = []
    for layer in range(num_layers):
        in_size = emb_dim if layer == 0 else 2 * hidden_size
        layer_p = {}
        for direction in ("fwd", "bwd"):
            w_ih = jax.random.uniform(next(k_iter), (4 * hidden_size, in_size),
                                      minval=-bound, maxval=bound,
                                      dtype=jnp.float32)
            w_hh = jax.random.uniform(next(k_iter), (4 * hidden_size, hidden_size),
                                      minval=-bound, maxval=bound,
                                      dtype=jnp.float32)
            b_ih = jax.random.uniform(next(k_iter), (4 * hidden_size,),
                                      minval=-bound, maxval=bound,
                                      dtype=jnp.float32)
            b_hh = jax.random.uniform(next(k_iter), (4 * hidden_size,),
                                      minval=-bound, maxval=bound,
                                      dtype=jnp.float32)
            layer_p[direction] = {"w_ih": w_ih, "w_hh": w_hh,
                                  "b_ih": b_ih, "b_hh": b_hh}
        layers.append(layer_p)

    return {"embedding": embedding, "lstm": layers,
            "hidden_size": hidden_size, "num_layers": num_layers}


def _pad_gate_cols(w_t, H, Hp):
    """(in, 4H) -> (in, 4Hp): pad each of the [i,f,g,o] gate blocks to Hp."""
    blocks = [jnp.pad(w_t[:, k * H:(k + 1) * H], ((0, 0), (0, Hp - H)))
              for k in range(4)]
    return jnp.concatenate(blocks, axis=1)


def _pad_gate_vec(b, H, Hp):
    blocks = [jnp.pad(b[k * H:(k + 1) * H], (0, Hp - H)) for k in range(4)]
    return jnp.concatenate(blocks)


def prepare_kernel_params(raw):
    H = raw["hidden_size"]
    Hp = _round_up(H, 128)               # lane-dense hidden size

    layers = []
    for li, layer_p in enumerate(raw["lstm"]):
        w_ih_dirs, bias_dirs, w_hh_dirs = [], [], []
        for direction in ("fwd", "bwd"):
            p = layer_p[direction]
            w_ih_t = _pad_gate_cols(p["w_ih"].T, H, Hp)       # (in_raw, 4Hp)
            if li > 0:
                # Layer>0 consumes the padded [fwd(Hp) | bwd(Hp)] activations:
                # scatter the real 2H input rows into a (2Hp, 4Hp) matrix so
                # the padded activation columns multiply zero weights.
                full = jnp.zeros((2 * Hp, 4 * Hp), jnp.float32)
                full = full.at[0:H].set(w_ih_t[0:H])
                full = full.at[Hp:Hp + H].set(w_ih_t[H:2 * H])
                w_ih_t = full
            w_ih_dirs.append(w_ih_t)

            bias_dirs.append(_pad_gate_vec(p["b_ih"] + p["b_hh"], H, Hp))

            w_hh_t = _pad_gate_cols(p["w_hh"].T, H, Hp)       # (H, 4Hp)
            w_hh_t = jnp.pad(w_hh_t, ((0, Hp - H), (0, 0)))   # (Hp, 4Hp)
            w_hh_dirs.append(w_hh_t.astype(jnp.bfloat16))

        layers.append({
            # One GEMM covers both directions: (in_padded, 8Hp) bf16.
            "w_ih_cat": jnp.concatenate(w_ih_dirs, axis=1).astype(jnp.bfloat16),
            "bias_cat": jnp.concatenate(bias_dirs),           # (8Hp,) f32
            "w_hh_fwd": w_hh_dirs[0],
            "w_hh_bwd": w_hh_dirs[1],
        })

    return {"embedding": raw["embedding"], "layers": layers,
            "hidden_size": H, "padded_hidden": Hp}


# ----------------------------------------------------------------------------
# Encoder forward (matches torch Encoder.forward in eval mode).
# ----------------------------------------------------------------------------
def encoder_forward(params, token_ids, *, time_chunk=None):
    """token_ids (B,T) int32 -> (out (B,T,2H), hidden (2L,B,H), cell (2L,B,H))."""
    B, T = token_ids.shape
    H = params["hidden_size"]
    Hp = params["padded_hidden"]
    Bp = _round_up(B, 8)                                   # full sublanes
    Tc = _pick_time_chunk(T) if time_chunk is None else time_chunk

    # Embedding lookup + eval-mode embedding dropout (identity).
    # TODO(synk): fuse the gather into the layer-0 kernel via scalar prefetch
    # (PrefetchScalarGridSpec) + pl.Element row gather instead of XLA take.
    emb = jnp.take(params["embedding"], token_ids, axis=0)     # (B, T, E)
    x = jnp.transpose(emb, (1, 0, 2))                          # time-major
    x = jnp.pad(x, ((0, 0), (0, Bp - B), (0, 0)))              # (T, Bp, E)

    hiddens, cells = [], []
    for layer in params["layers"]:
        # Hoisted input projection: one bf16 GEMM over all timesteps and BOTH
        # directions; only h@W_hh remains inside the serial recurrence.
        in_dim = x.shape[-1]
        pre = jnp.dot(x.reshape(T * Bp, in_dim).astype(jnp.bfloat16),
                      layer["w_ih_cat"],
                      preferred_element_type=jnp.float32)
        pre = pre.reshape(T, Bp, 8 * Hp) + layer["bias_cat"]
        pre_f = pre[..., :4 * Hp]
        pre_b = pre[..., 4 * Hp:]

        yf, hf, cf = _lstm_recurrence(pre_f, layer["w_hh_fwd"],
                                      reverse=False, time_chunk=Tc)
        yb, hb, cb = _lstm_recurrence(pre_b, layer["w_hh_bwd"],
                                      reverse=True, time_chunk=Tc)

        x = jnp.concatenate([yf, yb], axis=-1)                 # (T, Bp, 2Hp)
        hiddens.extend([hf[:B, :H], hb[:B, :H]])
        cells.extend([cf[:B, :H], cb[:B, :H]])
        # rnn_dropout between stacked layers: identity in eval mode.

    out = jnp.concatenate([x[:, :B, :H], x[:, :B, Hp:Hp + H]], axis=-1)
    out = jnp.transpose(out, (1, 0, 2))                        # (B, T, 2H)
    hidden = jnp.stack(hiddens, axis=0)                        # (2L, B, H)
    cell = jnp.stack(cells, axis=0)                            # (2L, B, H)
    return out, hidden, cell


# ----------------------------------------------------------------------------
# Pure-JAX f32 reference (torch.nn.LSTM semantics) for correctness checking.
# ----------------------------------------------------------------------------
def _lstm_dir_ref(x_tm, p, reverse):
    T, B, _ = x_tm.shape
    H = p["w_hh"].shape[1]

    def cell_fn(carry, x_t):
        h, c = carry
        gates = x_t @ p["w_ih"].T + h @ p["w_hh"].T + p["b_ih"] + p["b_hh"]
        i_g = jax.nn.sigmoid(gates[:, 0 * H:1 * H])
        f_g = jax.nn.sigmoid(gates[:, 1 * H:2 * H])
        g_g = jnp.tanh(gates[:, 2 * H:3 * H])
        o_g = jax.nn.sigmoid(gates[:, 3 * H:4 * H])
        c = f_g * c + i_g * g_g
        h = o_g * jnp.tanh(c)
        return (h, c), h

    xs = x_tm[::-1] if reverse else x_tm
    init = (jnp.zeros((B, H), jnp.float32), jnp.zeros((B, H), jnp.float32))
    (h, c), ys = jax.lax.scan(cell_fn, init, xs)
    if reverse:
        ys = ys[::-1]
    return ys, h, c


def encoder_reference(raw, token_ids):
    emb = jnp.take(raw["embedding"], token_ids, axis=0)
    x = jnp.transpose(emb, (1, 0, 2))
    hiddens, cells = [], []
    for layer_p in raw["lstm"]:
        yf, hf, cf = _lstm_dir_ref(x, layer_p["fwd"], reverse=False)
        yb, hb, cb = _lstm_dir_ref(x, layer_p["bwd"], reverse=True)
        x = jnp.concatenate([yf, yb], axis=-1)
        hiddens.extend([hf, hb])
        cells.extend([cf, cb])
    return (jnp.transpose(x, (1, 0, 2)),
            jnp.stack(hiddens, axis=0), jnp.stack(cells, axis=0))


if __name__ == "__main__":
    TOKENS_NUM = 50
    EMB_DIM = 32
    HIDDEN = 32
    NUM_LAYERS = 2
    B, T = 2, 8

    key = jax.random.PRNGKey(0)
    k_params, k_ids = jax.random.split(key)

    raw_params = init_encoder_params(k_params, TOKENS_NUM, EMB_DIM, HIDDEN,
                                     NUM_LAYERS)
    kernel_params = prepare_kernel_params(raw_params)
    token_ids = jax.random.randint(k_ids, (B, T), 0, TOKENS_NUM,
                                   dtype=jnp.int32)

    out, hidden, cell = encoder_forward(kernel_params, token_ids)
    jax.block_until_ready((out, hidden, cell))

    assert out.shape == (B, T, 2 * HIDDEN)
    assert hidden.shape == (NUM_LAYERS * 2, B, HIDDEN)
    assert cell.shape == (NUM_LAYERS * 2, B, HIDDEN)

    # Numerical check against the f32 reference (bf16 MXU ops -> loose tol).
    out_ref, hidden_ref, cell_ref = encoder_reference(raw_params, token_ids)
    assert bool(jnp.allclose(out, out_ref, atol=5e-2, rtol=5e-2))
    assert bool(jnp.allclose(hidden, hidden_ref, atol=5e-2, rtol=5e-2))
    assert bool(jnp.allclose(cell, cell_ref, atol=5e-2, rtol=5e-2))

    print("KERNEL_OK")
</pallas_src>

<mosaic_0001>
module attributes {stable_mosaic.version = 11 : i64} {
  func.func @_lstm_chunk_kernel(%arg0: i32, %arg1: memref<4x8x512xf32, #tpu.memory_space<vmem>>, %arg2: memref<128x512xbf16, #tpu.memory_space<vmem>>, %arg3: memref<4x8x128xf32, #tpu.memory_space<vmem>>, %arg4: memref<8x128xf32, #tpu.memory_space<vmem>>, %arg5: memref<8x128xf32, #tpu.memory_space<vmem>>, %arg6: memref<8x128xf32, #tpu.memory_space<vmem>>, %arg7: memref<8x128xf32, #tpu.memory_space<vmem>>) attributes {dimension_semantics = [#tpu.dimension_semantics<arbitrary>], iteration_bounds = array<i64: 2>, scalar_prefetch = 0 : i64, scratch_operands = 2 : i64, tpu.core_type = #tpu.core_type<tc>, window_params = [{transform_indices = @transform_0, window_bounds = array<i64: 4, 8, 512>}, {pipeline_mode = #tpu.pipeline_mode<synchronous>, transform_indices = @transform_1, window_bounds = array<i64: 128, 512>}, {transform_indices = @transform_2, window_bounds = array<i64: 4, 8, 128>}, {pipeline_mode = #tpu.pipeline_mode<synchronous>, transform_indices = @transform_3, window_bounds = array<i64: 8, 128>}, {pipeline_mode = #tpu.pipeline_mode<synchronous>, transform_indices = @transform_4, window_bounds = array<i64: 8, 128>}]} {
    %c0_i32 = arith.constant 0 : i32
    %0 = arith.cmpi eq, %arg0, %c0_i32 : i32
    %1 = arith.extui %0 : i1 to i32
    %c0_i32_0 = arith.constant 0 : i32
    %2 = arith.cmpi ne, %1, %c0_i32_0 : i32
    scf.if %2 {
      %cst_68 = arith.constant 0.000000e+00 : f32
      %163 = vector.broadcast %cst_68 : f32 to vector<8x128xf32>
      %c0_69 = arith.constant 0 : index
      %c0_70 = arith.constant 0 : index
      %164 = vector.load %arg6[%c0_69, %c0_70] : memref<8x128xf32, #tpu.memory_space<vmem>>, vector<8x128xf32>
      tpu.vector_store %arg6[%c0_69, %c0_70], %163 {strides = array<i32>} : memref<8x128xf32, #tpu.memory_space<vmem>>, vector<8x128xf32>,
      %cst_71 = arith.constant 0.000000e+00 : f32
      %165 = vector.broadcast %cst_71 : f32 to vector<8x128xf32>
      %c0_72 = arith.constant 0 : index
      %c0_73 = arith.constant 0 : index
      %166 = vector.load %arg7[%c0_72, %c0_73] : memref<8x128xf32, #tpu.memory_space<vmem>>, vector<8x128xf32>
      tpu.vector_store %arg7[%c0_72, %c0_73], %165 {strides = array<i32>} : memref<8x128xf32, #tpu.memory_space<vmem>>, vector<8x128xf32>,
    } else {
    }
    %c0 = arith.constant 0 : index
    %c0_1 = arith.constant 0 : index
    %3 = vector.load %arg2[%c0, %c0_1] : memref<128x512xbf16, #tpu.memory_space<vmem>>, vector<128x512xbf16>
    %c0_i32_2 = arith.constant 0 : i32
    %4 = arith.index_cast %c0_i32_2 : i32 to index
    %c0_3 = arith.constant 0 : index
    %c0_4 = arith.constant 0 : index
    %5 = vector.load %arg1[%4, %c0_3, %c0_4] : memref<4x8x512xf32, #tpu.memory_space<vmem>>, vector<1x8x512xf32>
    %6 = vector.shape_cast %5 : vector<1x8x512xf32> to vector<8x512xf32>
    %c0_5 = arith.constant 0 : index
    %c0_6 = arith.constant 0 : index
    %7 = vector.load %arg6[%c0_5, %c0_6] : memref<8x128xf32, #tpu.memory_space<vmem>>, vector<8x128xf32>
    %c0_7 = arith.constant 0 : index
    %c0_8 = arith.constant 0 : index
    %8 = vector.load %arg7[%c0_7, %c0_8] : memref<8x128xf32, #tpu.memory_space<vmem>>, vector<8x128xf32>
    %9 = arith.truncf %7 : vector<8x128xf32> to vector<8x128xbf16>
    %cst = arith.constant dense<0.000000e+00> : vector<8x512xf32>
    %10 = tpu.matmul %9, %3, %cst {dimension_numbers = #tpu.dot_dimension_numbers<[1], [0], [0], [1], [0, 0, 1, 1], [], []>} : vector<8x128xbf16>, vector<128x512xbf16>, vector<8x512xf32> -> vector<8x512xf32>
    %11 = arith.addf %6, %10 : vector<8x512xf32>
    %12 = vector.extract_strided_slice %11 {offsets = [0, 0], sizes = [8, 128], strides = [1, 1]} : vector<8x512xf32> to vector<8x128xf32>
    %13 = arith.negf %12 : vector<8x128xf32>
    %14 = math.exp %13 : vector<8x128xf32>
    %cst_9 = arith.constant 1.000000e+00 : f32
    %15 = vector.broadcast %cst_9 : f32 to vector<8x128xf32>
    %16 = arith.addf %15, %14 : vector<8x128xf32>
    %17 = arith.divf %15, %16 : vector<8x128xf32>
    %18 = vector.extract_strided_slice %11 {offsets = [0, 128], sizes = [8, 128], strides = [1, 1]} : vector<8x512xf32> to vector<8x128xf32>
    %19 = arith.negf %18 : vector<8x128xf32>
    %20 = math.exp %19 : vector<8x128xf32>
    %cst_10 = arith.constant 1.000000e+00 : f32
    %21 = vector.broadcast %cst_10 : f32 to vector<8x128xf32>
    %22 = arith.addf %21, %20 : vector<8x128xf32>
    %23 = arith.divf %21, %22 : vector<8x128xf32>
    %24 = vector.extract_strided_slice %11 {offsets = [0, 256], sizes = [8, 128], strides = [1, 1]} : vector<8x512xf32> to vector<8x128xf32>
    %25 = math.tanh %24 : vector<8x128xf32>
    %26 = vector.extract_strided_slice %11 {offsets = [0, 384], sizes = [8, 128], strides = [1, 1]} : vector<8x512xf32> to vector<8x128xf32>
    %27 = arith.negf %26 : vector<8x128xf32>
    %28 = math.exp %27 : vector<8x128xf32>
    %cst_11 = arith.constant 1.000000e+00 : f32
    %29 = vector.broadcast %cst_11 : f32 to vector<8x128xf32>
    %30 = arith.addf %29, %28 : vector<8x128xf32>
    %31 = arith.divf %29, %30 : vector<8x128xf32>
    %32 = arith.mulf %23, %8 : vector<8x128xf32>
    %33 = arith.mulf %17, %25 : vector<8x128xf32>
    %34 = arith.addf %32, %33 : vector<8x128xf32>
    %35 = math.tanh %34 : vector<8x128xf32>
    %36 = arith.mulf %31, %35 : vector<8x128xf32>
    %c0_12 = arith.constant 0 : index
    %c0_13 = arith.constant 0 : index
    %37 = vector.load %arg7[%c0_12, %c0_13] : memref<8x128xf32, #tpu.memory_space<vmem>>, vector<8x128xf32>
    tpu.vector_store %arg7[%c0_12, %c0_13], %34 {strides = array<i32>} : memref<8x128xf32, #tpu.memory_space<vmem>>, vector<8x128xf32>,
    %c0_14 = arith.constant 0 : index
    %c0_15 = arith.constant 0 : index
    %38 = vector.load %arg6[%c0_14, %c0_15] : memref<8x128xf32, #tpu.memory_space<vmem>>, vector<8x128xf32>
    tpu.vector_store %arg6[%c0_14, %c0_15], %36 {strides = array<i32>} : memref<8x128xf32, #tpu.memory_space<vmem>>, vector<8x128xf32>,
    %39 = arith.index_cast %c0_i32_2 : i32 to index
    %c0_16 = arith.constant 0 : index
    %c0_17 = arith.constant 0 : index
    %40 = vector.load %arg3[%39, %c0_16, %c0_17] : memref<4x8x128xf32, #tpu.memory_space<vmem>>, vector<1x8x128xf32>
    %41 = vector.shape_cast %40 : vector<1x8x128xf32> to vector<8x128xf32>
    %42 = vector.shape_cast %36 : vector<8x128xf32> to vector<1x8x128xf32>
    tpu.vector_store %arg3[%39, %c0_16, %c0_17], %42 {strides = array<i32>} : memref<4x8x128xf32, #tpu.memory_space<vmem>>, vector<1x8x128xf32>,
    %c1_i32 = arith.constant 1 : i32
    %43 = arith.index_cast %c1_i32 : i32 to index
    %c0_18 = arith.constant 0 : index
    %c0_19 = arith.constant 0 : index
    %44 = vector.load %arg1[%43, %c0_18, %c0_19] : memref<4x8x512xf32, #tpu.memory_space<vmem>>, vector<1x8x512xf32>
    %45 = vector.shape_cast %44 : vector<1x8x512xf32> to vector<8x512xf32>
    %c0_20 = arith.constant 0 : index
    %c0_21 = arith.constant 0 : index
    %46 = vector.load %arg6[%c0_20, %c0_21] : memref<8x128xf32, #tpu.memory_space<vmem>>, vector<8x128xf32>
    %c0_22 = arith.constant 0 : index
    %c0_23 = arith.constant 0 : index
    %47 = vector.load %arg7[%c0_22, %c0_23] : memref<8x128xf32, #tpu.memory_space<vmem>>, vector<8x128xf32>
    %48 = arith.truncf %46 : vector<8x128xf32> to vector<8x128xbf16>
    %cst_24 = arith.constant dense<0.000000e+00> : vector<8x512xf32>
    %49 = tpu.matmul %48, %3, %cst_24 {dimension_numbers = #tpu.dot_dimension_numbers<[1], [0], [0], [1], [0, 0, 1, 1], [], []>} : vector<8x128xbf16>, vector<128x512xbf16>, vector<8x512xf32> -> vector<8x512xf32>
    %50 = arith.addf %45, %49 : vector<8x512xf32>
    %51 = vector.extract_strided_slice %50 {offsets = [0, 0], sizes = [8, 128], strides = [1, 1]} : vector<8x512xf32> to vector<8x128xf32>
    %52 = arith.negf %51 : vector<8x128xf32>
    %53 = math.exp %52 : vector<8x128xf32>
    %cst_25 = arith.constant 1.000000e+00 : f32
    %54 = vector.broadcast %cst_25 : f32 to vector<8x128xf32>
    %55 = arith.addf %54, %53 : vector<8x128xf32>
    %56 = arith.divf %54, %55 : vector<8x128xf32>
    %57 = vector.extract_strided_slice %50 {offsets = [0, 128], sizes = [8, 128], strides = [1, 1]} : vector<8x512xf32> to vector<8x128xf32>
    %58 = arith.negf %57 : vector<8x128xf32>
    %59 = math.exp %58 : vector<8x128xf32>
    %cst_26 = arith.constant 1.000000e+00 : f32
    %60 = vector.broadcast %cst_26 : f32 to vector<8x128xf32>
    %61 = arith.addf %60, %59 : vector<8x128xf32>
    %62 = arith.divf %60, %61 : vector<8x128xf32>
    %63 = vector.extract_strided_slice %50 {offsets = [0, 256], sizes = [8, 128], strides = [1, 1]} : vector<8x512xf32> to vector<8x128xf32>
    %64 = math.tanh %63 : vector<8x128xf32>
    %65 = vector.extract_strided_slice %50 {offsets = [0, 384], sizes = [8, 128], strides = [1, 1]} : vector<8x512xf32> to vector<8x128xf32>
    %66 = arith.negf %65 : vector<8x128xf32>
    %67 = math.exp %66 : vector<8x128xf32>
    %cst_27 = arith.constant 1.000000e+00 : f32
    %68 = vector.broadcast %cst_27 : f32 to vector<8x128xf32>
    %69 = arith.addf %68, %67 : vector<8x128xf32>
    %70 = arith.divf %68, %69 : vector<8x128xf32>
    %71 = arith.mulf %62, %47 : vector<8x128xf32>
    %72 = arith.mulf %56, %64 : vector<8x128xf32>
    %73 = arith.addf %71, %72 : vector<8x128xf32>
    %74 = math.tanh %73 : vector<8x128xf32>
    %75 = arith.mulf %70, %74 : vector<8x128xf32>
    %c0_28 = arith.constant 0 : index
    %c0_29 = arith.constant 0 : index
    %76 = vector.load %arg7[%c0_28, %c0_29] : memref<8x128xf32, #tpu.memory_space<vmem>>, vector<8x128xf32>
    tpu.vector_store %arg7[%c0_28, %c0_29], %73 {strides = array<i32>} : memref<8x128xf32, #tpu.memory_space<vmem>>, vector<8x128xf32>,
    %c0_30 = arith.constant 0 : index
    %c0_31 = arith.constant 0 : index
    %77 = vector.load %arg6[%c0_30, %c0_31] : memref<8x128xf32, #tpu.memory_space<vmem>>, vector<8x128xf32>
    tpu.vector_store %arg6[%c0_30, %c0_31], %75 {strides = array<i32>} : memref<8x128xf32, #tpu.memory_space<vmem>>, vector<8x128xf32>,
    %78 = arith.index_cast %c1_i32 : i32 to index
    %c0_32 = arith.constant 0 : index
    %c0_33 = arith.constant 0 : index
    %79 = vector.load %arg3[%78, %c0_32, %c0_33] : memref<4x8x128xf32, #tpu.memory_space<vmem>>, vector<1x8x128xf32>
    %80 = vector.shape_cast %79 : vector<1x8x128xf32> to vector<8x128xf32>
    %81 = vector.shape_cast %75 : vector<8x128xf32> to vector<1x8x128xf32>
    tpu.vector_store %arg3[%78, %c0_32, %c0_33], %81 {strides = array<i32>} : memref<4x8x128xf32, #tpu.memory_space<vmem>>, vector<1x8x128xf32>,
    %c2_i32 = arith.constant 2 : i32
    %82 = arith.index_cast %c2_i32 : i32 to index
    %c0_34 = arith.constant 0 : index
    %c0_35 = arith.constant 0 : index
    %83 = vector.load %arg1[%82, %c0_34, %c0_35] : memref<4x8x512xf32, #tpu.memory_space<vmem>>, vector<1x8x512xf32>
    %84 = vector.shape_cast %83 : vector<1x8x512xf32> to vector<8x512xf32>
    %c0_36 = arith.constant 0 : index
    %c0_37 = arith.constant 0 : index
    %85 = vector.load %arg6[%c0_36, %c0_37] : memref<8x128xf32, #tpu.memory_space<vmem>>, vector<8x128xf32>
    %c0_38 = arith.constant 0 : index
    %c0_39 = arith.constant 0 : index
    %86 = vector.load %arg7[%c0_38, %c0_39] : memref<8x128xf32, #tpu.memory_space<vmem>>, vector<8x128xf32>
    %87 = arith.truncf %85 : vector<8x128xf32> to vector<8x128xbf16>
    %cst_40 = arith.constant dense<0.000000e+00> : vector<8x512xf32>
    %88 = tpu.matmul %87, %3, %cst_40 {dimension_numbers = #tpu.dot_dimension_numbers<[1], [0], [0], [1], [0, 0, 1, 1], [], []>} : vector<8x128xbf16>, vector<128x512xbf16>, vector<8x512xf32> -> vector<8x512xf32>
    %89 = arith.addf %84, %88 : vector<8x512xf32>
    %90 = vector.extract_strided_slice %89 {offsets = [0, 0], sizes = [8, 128], strides = [1, 1]} : vector<8x512xf32> to vector<8x128xf32>
    %91 = arith.negf %90 : vector<8x128xf32>
    %92 = math.exp %91 : vector<8x128xf32>
    %cst_41 = arith.constant 1.000000e+00 : f32
    %93 = vector.broadcast %cst_41 : f32 to vector<8x128xf32>
    %94 = arith.addf %93, %92 : vector<8x128xf32>
    %95 = arith.divf %93, %94 : vector<8x128xf32>
    %96 = vector.extract_strided_slice %89 {offsets = [0, 128], sizes = [8, 128], strides = [1, 1]} : vector<8x512xf32> to vector<8x128xf32>
    %97 = arith.negf %96 : vector<8x128xf32>
    %98 = math.exp %97 : vector<8x128xf32>
    %cst_42 = arith.constant 1.000000e+00 : f32
    %99 = vector.broadcast %cst_42 : f32 to vector<8x128xf32>
    %100 = arith.addf %99, %98 : vector<8x128xf32>
    %101 = arith.divf %99, %100 : vector<8x128xf32>
    %102 = vector.extract_strided_slice %89 {offsets = [0, 256], sizes = [8, 128], strides = [1, 1]} : vector<8x512xf32> to vector<8x128xf32>
    %103 = math.tanh %102 : vector<8x128xf32>
    %104 = vector.extract_strided_slice %89 {offsets = [0, 384], sizes = [8, 128], strides = [1, 1]} : vector<8x512xf32> to vector<8x128xf32>
    %105 = arith.negf %104 : vector<8x128xf32>
    %106 = math.exp %105 : vector<8x128xf32>
    %cst_43 = arith.constant 1.000000e+00 : f32
    %107 = vector.broadcast %cst_43 : f32 to vector<8x128xf32>
    %108 = arith.addf %107, %106 : vector<8x128xf32>
    %109 = arith.divf %107, %108 : vector<8x128xf32>
    %110 = arith.mulf %101, %86 : vector<8x128xf32>
    %111 = arith.mulf %95, %103 : vector<8x128xf32>
    %112 = arith.addf %110, %111 : vector<8x128xf32>
    %113 = math.tanh %112 : vector<8x128xf32>
    %114 = arith.mulf %109, %113 : vector<8x128xf32>
    %c0_44 = arith.constant 0 : index
    %c0_45 = arith.constant 0 : index
    %115 = vector.load %arg7[%c0_44, %c0_45] : memref<8x128xf32, #tpu.memory_space<vmem>>, vector<8x128xf32>
    tpu.vector_store %arg7[%c0_44, %c0_45], %112 {strides = array<i32>} : memref<8x128xf32, #tpu.memory_space<vmem>>, vector<8x128xf32>,
    %c0_46 = arith.constant 0 : index
    %c0_47 = arith.constant 0 : index
    %116 = vector.load %arg6[%c0_46, %c0_47] : memref<8x128xf32, #tpu.memory_space<vmem>>, vector<8x128xf32>
    tpu.vector_store %arg6[%c0_46, %c0_47], %114 {strides = array<i32>} : memref<8x128xf32, #tpu.memory_space<vmem>>, vector<8x128xf32>,
    %117 = arith.index_cast %c2_i32 : i32 to index
    %c0_48 = arith.constant 0 : index
    %c0_49 = arith.constant 0 : index
    %118 = vector.load %arg3[%117, %c0_48, %c0_49] : memref<4x8x128xf32, #tpu.memory_space<vmem>>, vector<1x8x128xf32>
    %119 = vector.shape_cast %118 : vector<1x8x128xf32> to vector<8x128xf32>
    %120 = vector.shape_cast %114 : vector<8x128xf32> to vector<1x8x128xf32>
    tpu.vector_store %arg3[%117, %c0_48, %c0_49], %120 {strides = array<i32>} : memref<4x8x128xf32, #tpu.memory_space<vmem>>, vector<1x8x128xf32>,
    %c3_i32 = arith.constant 3 : i32
    %121 = arith.index_cast %c3_i32 : i32 to index
    %c0_50 = arith.constant 0 : index
    %c0_51 = arith.constant 0 : index
    %122 = vector.load %arg1[%121, %c0_50, %c0_51] : memref<4x8x512xf32, #tpu.memory_space<vmem>>, vector<1x8x512xf32>
    %123 = vector.shape_cast %122 : vector<1x8x512xf32> to vector<8x512xf32>
    %c0_52 = arith.constant 0 : index
    %c0_53 = arith.constant 0 : index
    %124 = vector.load %arg6[%c0_52, %c0_53] : memref<8x128xf32, #tpu.memory_space<vmem>>, vector<8x128xf32>
    %c0_54 = arith.constant 0 : index
    %c0_55 = arith.constant 0 : index
    %125 = vector.load %arg7[%c0_54, %c0_55] : memref<8x128xf32, #tpu.memory_space<vmem>>, vector<8x128xf32>
    %126 = arith.truncf %124 : vector<8x128xf32> to vector<8x128xbf16>
    %cst_56 = arith.constant dense<0.000000e+00> : vector<8x512xf32>
    %127 = tpu.matmul %126, %3, %cst_56 {dimension_numbers = #tpu.dot_dimension_numbers<[1], [0], [0], [1], [0, 0, 1, 1], [], []>} : vector<8x128xbf16>, vector<128x512xbf16>, vector<8x512xf32> -> vector<8x512xf32>
    %128 = arith.addf %123, %127 : vector<8x512xf32>
    %129 = vector.extract_strided_slice %128 {offsets = [0, 0], sizes = [8, 128], strides = [1, 1]} : vector<8x512xf32> to vector<8x128xf32>
    %130 = arith.negf %129 : vector<8x128xf32>
    %131 = math.exp %130 : vector<8x128xf32>
    %cst_57 = arith.constant 1.000000e+00 : f32
    %132 = vector.broadcast %cst_57 : f32 to vector<8x128xf32>
    %133 = arith.addf %132, %131 : vector<8x128xf32>
    %134 = arith.divf %132, %133 : vector<8x128xf32>
    %135 = vector.extract_strided_slice %128 {offsets = [0, 128], sizes = [8, 128], strides = [1, 1]} : vector<8x512xf32> to vector<8x128xf32>
    %136 = arith.negf %135 : vector<8x128xf32>
    %137 = math.exp %136 : vector<8x128xf32>
    %cst_58 = arith.constant 1.000000e+00 : f32
    %138 = vector.broadcast %cst_58 : f32 to vector<8x128xf32>
    %139 = arith.addf %138, %137 : vector<8x128xf32>
    %140 = arith.divf %138, %139 : vector<8x128xf32>
    %141 = vector.extract_strided_slice %128 {offsets = [0, 256], sizes = [8, 128], strides = [1, 1]} : vector<8x512xf32> to vector<8x128xf32>
    %142 = math.tanh %141 : vector<8x128xf32>
    %143 = vector.extract_strided_slice %128 {offsets = [0, 384], sizes = [8, 128], strides = [1, 1]} : vector<8x512xf32> to vector<8x128xf32>
    %144 = arith.negf %143 : vector<8x128xf32>
    %145 = math.exp %144 : vector<8x128xf32>
    %cst_59 = arith.constant 1.000000e+00 : f32
    %146 = vector.broadcast %cst_59 : f32 to vector<8x128xf32>
    %147 = arith.addf %146, %145 : vector<8x128xf32>
    %148 = arith.divf %146, %147 : vector<8x128xf32>
    %149 = arith.mulf %140, %125 : vector<8x128xf32>
    %150 = arith.mulf %134, %142 : vector<8x128xf32>
    %151 = arith.addf %149, %150 : vector<8x128xf32>
    %152 = math.tanh %151 : vector<8x128xf32>
    %153 = arith.mulf %148, %152 : vector<8x128xf32>
    %c0_60 = arith.constant 0 : index
    %c0_61 = arith.constant 0 : index
    %154 = vector.load %arg7[%c0_60, %c0_61] : memref<8x128xf32, #tpu.memory_space<vmem>>, vector<8x128xf32>
    tpu.vector_store %arg7[%c0_60, %c0_61], %151 {strides = array<i32>} : memref<8x128xf32, #tpu.memory_space<vmem>>, vector<8x128xf32>,
    %c0_62 = arith.constant 0 : index
    %c0_63 = arith.constant 0 : index
    %155 = vector.load %arg6[%c0_62, %c0_63] : memref<8x128xf32, #tpu.memory_space<vmem>>, vector<8x128xf32>
    tpu.vector_store %arg6[%c0_62, %c0_63], %153 {strides = array<i32>} : memref<8x128xf32, #tpu.memory_space<vmem>>, vector<8x128xf32>,
    %156 = arith.index_cast %c3_i32 : i32 to index
    %c0_64 = arith.constant 0 : index
    %c0_65 = arith.constant 0 : index
    %157 = vector.load %arg3[%156, %c0_64, %c0_65] : memref<4x8x128xf32, #tpu.memory_space<vmem>>, vector<1x8x128xf32>
    %158 = vector.shape_cast %157 : vector<1x8x128xf32> to vector<8x128xf32>
    %159 = vector.shape_cast %153 : vector<8x128xf32> to vector<1x8x128xf32>
    tpu.vector_store %arg3[%156, %c0_64, %c0_65], %159 {strides = array<i32>} : memref<4x8x128xf32, #tpu.memory_space<vmem>>, vector<1x8x128xf32>,
    %c4_i32 = arith.constant 4 : i32
    %c1_i32_66 = arith.constant 1 : i32
    %160 = arith.cmpi eq, %arg0, %c1_i32_66 : i32
    %161 = arith.extui %160 : i1 to i32
    %c0_i32_67 = arith.constant 0 : i32
    %162 = arith.cmpi ne, %161, %c0_i32_67 : i32
    scf.if %162 {
      %c0_68 = arith.constant 0 : index
      %c0_69 = arith.constant 0 : index
      %163 = vector.load %arg6[%c0_68, %c0_69] : memref<8x128xf32, #tpu.memory_space<vmem>>, vector<8x128xf32>
      %c0_70 = arith.constant 0 : index
      %c0_71 = arith.constant 0 : index
      %164 = vector.load %arg4[%c0_70, %c0_71] : memref<8x128xf32, #tpu.memory_space<vmem>>, vector<8x128xf32>
      tpu.vector_store %arg4[%c0_70, %c0_71], %163 {strides = array<i32>} : memref<8x128xf32, #tpu.memory_space<vmem>>, vector<8x128xf32>,
      %c0_72 = arith.constant 0 : index
      %c0_73 = arith.constant 0 : index
      %165 = vector.load %arg7[%c0_72, %c0_73] : memref<8x128xf32, #tpu.memory_space<vmem>>, vector<8x128xf32>
      %c0_74 = arith.constant 0 : index
      %c0_75 = arith.constant 0 : index
      %166 = vector.load %arg5[%c0_74, %c0_75] : memref<8x128xf32, #tpu.memory_space<vmem>>, vector<8x128xf32>
      tpu.vector_store %arg5[%c0_74, %c0_75], %165 {strides = array<i32>} : memref<8x128xf32, #tpu.memory_space<vmem>>, vector<8x128xf32>,
    } else {
    }
    return
  }
  func.func @transform_0(%arg0: i32) -> (i32, i32, i32) {
    %c0_i32 = arith.constant 0 : i32
    %c0_i32_0 = arith.constant 0 : i32
    %c0_i32_1 = arith.constant 0 : i32
    return %arg0, %c0_i32, %c0_i32_0 : i32, i32, i32
  }
  func.func @transform_1(%arg0: i32) -> (i32, i32) {
    %c0_i32 = arith.constant 0 : i32
    %c0_i32_0 = arith.constant 0 : i32
    %c0_i32_1 = arith.constant 0 : i32
    return %c0_i32, %c0_i32_0 : i32, i32
  }
  func.func @transform_2(%arg0: i32) -> (i32, i32, i32) {
    %c0_i32 = arith.constant 0 : i32
    %c0_i32_0 = arith.constant 0 : i32
    %c0_i32_1 = arith.constant 0 : i32
    return %arg0, %c0_i32, %c0_i32_0 : i32, i32, i32
  }
  func.func @transform_3(%arg0: i32) -> (i32, i32) {
    %c0_i32 = arith.constant 0 : i32
    %c0_i32_0 = arith.constant 0 : i32
    %c0_i32_1 = arith.constant 0 : i32
    return %c0_i32, %c0_i32_0 : i32, i32
  }
  func.func @transform_4(%arg0: i32) -> (i32, i32) {
    %c0_i32 = arith.constant 0 : i32
    %c0_i32_0 = arith.constant 0 : i32
    %c0_i32_1 = arith.constant 0 : i32
    return %c0_i32, %c0_i32_0 : i32, i32
  }
}

</mosaic_0001>

<llo_original>
// kernel: tpu_custom_call.1
$region0: #{tpu_custom_call.1}
  #allocation0 [shape = 'u32[]', space=smem, size = 0x4, offset = 0x4, fixed_abs, tag = 'smem constant byte address 0x4 - core index']
  #allocation1 [shape = 'u32[144,128]{1,0:T(1,128)}', space=vmem, size = 0x12000, scoped, tag = 'internal scratch']
  #allocation2 [shape = 'f32[8,128]{1,0:T(8,128)}', space=vmem, size = 0x1000, scoped, tag = 'scratch operand']
  #allocation3 [shape = 'f32[8,128]{1,0:T(8,128)}', space=vmem, size = 0x1000, scoped, tag = 'scratch operand']
  %s0 = inlined_call_operand.hbm [shape: f32[8,8,512], index: 0, kind: input, shape index: {}]
  %s1 = inlined_call_operand.hbm [shape: bf16[128,512], index: 1, kind: input, shape index: {}]
  %s2 = inlined_call_operand.hbm [shape: f32[8,8,128], index: 2, kind: output, shape index: {0}]
  %s3 = inlined_call_operand.hbm [shape: f32[8,128], index: 3, kind: output, shape index: {1}]
  %s4 = inlined_call_operand.hbm [shape: f32[8,128], index: 4, kind: output, shape index: {2}]
  %5 = xla_tuple %s2, %s3, %s4
  %s6 = sld [smem:[#allocation0]]
  $region73: #{tpu_custom_call.1} parent=0
    _
  %s8 = ssub.s32 1, %s6
  %s9 = scalar_select 0, %s8, %s6
  $region1: #{tpu_custom_call.1} parent=0
    #allocation4 [shape = 'u8[131072]{0}', space=vmem, size = 0x20000, scoped, tag = 'input window, operand 0']
    #allocation5 [shape = 's32[2]{0}', space=sflag, size = 0x8, scoped, tag = 'scoped memory for tpu_custom_call.1']
    #allocation6 [shape = 's32[2]{0}', space=sflag, size = 0x8, scoped, tag = 'scoped memory for tpu_custom_call.1']
    #allocation7 [shape = 'u8[131072]{0}', space=vmem, size = 0x20000, scoped, tag = 'input window, operand 1, single buffered']
    #allocation8 [shape = 's32[1]{0}', space=sflag, size = 0x4, scoped, tag = 'scoped memory for tpu_custom_call.1']
    #allocation9 [shape = 'u8[32768]{0}', space=vmem, size = 0x8000, scoped, tag = 'output window, operand 0']
    #allocation10 [shape = 'u8[4096]{0}', space=vmem, size = 0x1000, scoped, tag = 'output window, operand 1, single buffered']
    #allocation11 [shape = 's32[1]{0}', space=sflag, size = 0x4, scoped, tag = 'scoped memory for tpu_custom_call.1']
    #allocation12 [shape = 'u8[4096]{0}', space=vmem, size = 0x1000, scoped, tag = 'output window, operand 2, single buffered']
    %10 = vsyncpa [#allocation5], 0
    %s11 = scalar_lea.sflag [#allocation5], 1
    %12 = vsyncpa %s11, 0
    %13 = vsyncpa [#allocation8], 0
    %14 = vsyncpa [#allocation6], 0
    %s15 = scalar_lea.sflag [#allocation6], 1
    %16 = vsyncpa %s15, 0
    %17 = vsyncpa [#allocation11], 0
    loop: start=0, step=1, limit=4
    $region2: #{tpu_custom_call.1} parent=1 // loop_pre_header
      _
    $region3: #{tpu_custom_call.1} parent=1 // loop_header
      %s19 = sphi 0, %s23
      %p20 = scmp.ge.s32.totalorder %s19, 4
      %s29 = sphi 0, %s31
      %s32 = sphi 0, %s29
      %s33 = sphi 0, %s32
      %s49 = sphi 0, %s33
      %s53 = sphi 0, %s53
      %s55 = sphi 0, %s53
      %s56 = sphi 0, %s55
      %s70 = sphi 0, %s56
      %s76 = sphi 0, %s78
      %s79 = sphi 0, %s76
      %s80 = sphi 0, %s79
      %s96 = sphi 0, %s80
      %s100 = sphi 0, %s100
      %s102 = sphi 0, %s100
      %s103 = sphi 0, %s102
      %s117 = sphi 0, %s103
      %s121 = sphi 0, %s121
      %s123 = sphi 0, %s121
      %s124 = sphi 0, %s123
      %s138 = sphi 0, %s124
    $region4: #{tpu_custom_call.1} parent=1 // loop_header_branch
      %22 = sbr.rel (%p20) target = $region8
    $region5: #{tpu_custom_call.1} parent=1 // loop_body
      %s24 = ssub.s32 %s19, 1
      %s25 = ssub.s32 %s19, 2
      %s26 = sadd.s32 %s19, 1
      %s27 = ssub.s32 %s19, %s26
      %p28 = scmp.eq.s32.totalorder %s27, 0
      %s30 = sadd.s32 %s29, 1
      %s31 = scalar_select %p28, %s29, %s30
      %p34 = pneg %p28
      %p35 = scmp.eq.s32.totalorder %s19, 1
      %p36 = por %p34, %p35
      %p37 = scmp.ne.s32.totalorder %s29, %s32
      %p38 = scmp.eq.s32.totalorder %s19, 0
      %p39 = por %p37, %p38
      %p40 = scmp.ne.s32.totalorder %s29, %s32
      %p41 = scmp.eq.s32.totalorder %s24, 1
      %p42 = por %p40, %p41
      %p43 = scmp.ne.s32.totalorder %s32, %s33
      %p44 = scmp.eq.s32.totalorder %s24, 0
      %p45 = por %p43, %p44
      %p46 = scmp.ne.s32.totalorder %s32, %s33
      %p47 = scmp.eq.s32.totalorder %s25, 1
      %p48 = por %p46, %p47
      %p50 = scmp.ne.s32.totalorder %s33, %s49
      %p51 = scmp.eq.s32.totalorder %s25, 0
      %p52 = por %p50, %p51
      %s54 = sadd.s32 %s53, 1
      %p57 = scmp.eq.s32.totalorder %s19, 1
      %p58 = scmp.ne.s32.totalorder %s53, %s55
      %p59 = scmp.eq.s32.totalorder %s19, 0
      %p60 = por %p58, %p59
      %p61 = scmp.ne.s32.totalorder %s53, %s55
      %p62 = scmp.eq.s32.totalorder %s24, 1
      %p63 = por %p61, %p62
      %p64 = scmp.ne.s32.totalorder %s55, %s56
      %p65 = scmp.eq.s32.totalorder %s24, 0
      %p66 = por %p64, %p65
      %p67 = scmp.ne.s32.totalorder %s55, %s56
      %p68 = scmp.eq.s32.totalorder %s25, 1
      %p69 = por %p67, %p68
      %p71 = scmp.ne.s32.totalorder %s56, %s70
      %p72 = scmp.eq.s32.totalorder %s25, 0
      %p73 = por %p71, %p72
      %s74 = ssub.s32 %s19, %s26
      %p75 = scmp.eq.s32.totalorder %s74, 0
      %s77 = sadd.s32 %s76, 1
      %s78 = scalar_select %p75, %s76, %s77
      %p81 = pneg %p75
      %p82 = scmp.eq.s32.totalorder %s19, 1
      %p83 = por %p81, %p82
      %p84 = scmp.ne.s32.totalorder %s76, %s79
      %p85 = scmp.eq.s32.totalorder %s19, 0
      %p86 = por %p84, %p85
      %p87 = scmp.ne.s32.totalorder %s76, %s79
      %p88 = scmp.eq.s32.totalorder %s24, 1
      %p89 = por %p87, %p88
      %p90 = scmp.ne.s32.totalorder %s79, %s80
      %p91 = scmp.eq.s32.totalorder %s24, 0
      %p92 = por %p90, %p91
      %p93 = scmp.ne.s32.totalorder %s79, %s80
      %p94 = scmp.eq.s32.totalorder %s25, 1
      %p95 = por %p93, %p94
      %p97 = scmp.ne.s32.totalorder %s80, %s96
      %p98 = scmp.eq.s32.totalorder %s25, 0
      %p99 = por %p97, %p98
      %s101 = sadd.s32 %s100, 1
      %p104 = scmp.eq.s32.totalorder %s19, 1
      %p105 = scmp.ne.s32.totalorder %s100, %s102
      %p106 = scmp.eq.s32.totalorder %s19, 0
      %p107 = por %p105, %p106
      %p108 = scmp.ne.s32.totalorder %s100, %s102
      %p109 = scmp.eq.s32.totalorder %s24, 1
      %p110 = por %p108, %p109
      %p111 = scmp.ne.s32.totalorder %s102, %s103
      %p112 = scmp.eq.s32.totalorder %s24, 0
      %p113 = por %p111, %p112
      %p114 = scmp.ne.s32.totalorder %s102, %s103
      %p115 = scmp.eq.s32.totalorder %s25, 1
      %p116 = por %p114, %p115
      %p118 = scmp.ne.s32.totalorder %s103, %s117
      %p119 = scmp.eq.s32.totalorder %s25, 0
      %p120 = por %p118, %p119
      %s122 = sadd.s32 %s121, 1
      %p125 = scmp.eq.s32.totalorder %s19, 1
      %p126 = scmp.ne.s32.totalorder %s121, %s123
      %p127 = scmp.eq.s32.totalorder %s19, 0
      %p128 = por %p126, %p127
      %p129 = scmp.ne.s32.totalorder %s121, %s123
      %p130 = scmp.eq.s32.totalorder %s24, 1
      %p131 = por %p129, %p130
      %p132 = scmp.ne.s32.totalorder %s123, %s124
      %p133 = scmp.eq.s32.totalorder %s24, 0
      %p134 = por %p132, %p133
      %p135 = scmp.ne.s32.totalorder %s123, %s124
      %p136 = scmp.eq.s32.totalorder %s25, 1
      %p137 = por %p135, %p136
      %p139 = scmp.ne.s32.totalorder %s124, %s138
      %p140 = scmp.eq.s32.totalorder %s25, 0
      %p141 = por %p139, %p140
      %p142 = scmp.le.s32.totalorder 1, %s19
      %p143 = scmp.lt.s32.totalorder %s19, 3
      %p144 = pnand %p142, %p143
      %p145 = pneg %p144
      // Predicated region
      $region9: #{tpu_custom_call.1} parent=5 // pred_check
        _
      $region10: #{tpu_custom_call.1} parent=5 // pred_check_branch
        %147 = sbr.rel (%p144) target = $region12
      $region11: #{tpu_custom_call.1} parent=5 // pred_region
        %s148 = ssub.s32 %s19, 1
        // Predicated region
        $region13: #{tpu_custom_call.1} parent=11 // pred_check
          %p149 = pneg %p66
        $region14: #{tpu_custom_call.1} parent=11 // pred_check_branch
          %151 = sbr.rel (%p149) target = $region16
        $region15: #{tpu_custom_call.1} parent=11 // pred_region
          %s153 = ssub.s32 4096, 4096
          %154 = vsyncadd [#allocation8], %s153
          %s155 = sshll.u32 [#allocation7], 4
          %s156 = int_to_ptr.vmem [resolvable:$true] %s155
          %161 = dma.hbm_to_vmem [thread:$0]  %s1, 4096, %s156, [#allocation8], 256, 256, 16
        $region16: #{tpu_custom_call.1} parent=11 // pred_fallthru
          _
      $region12: #{tpu_custom_call.1} parent=5 // pred_fallthru
        _
      %p162 = scmp.lt.s32.totalorder %s19, 2
      // Predicated region
      $region17: #{tpu_custom_call.1} parent=5 // pred_check
        %p163 = pneg %p162
      $region18: #{tpu_custom_call.1} parent=5 // pred_check_branch
        %165 = sbr.rel (%p163) target = $region20
      $region19: #{tpu_custom_call.1} parent=5 // pred_region
        // Predicated region
        $region21: #{tpu_custom_call.1} parent=19 // pred_check
          %p166 = pneg %p39
        $region22: #{tpu_custom_call.1} parent=19 // pred_check_branch
          %168 = sbr.rel (%p166) target = $region24
        $region23: #{tpu_custom_call.1} parent=19 // pred_region
          %s169 = sand.u32 %s29, 1
          %s170 = scalar_lea.sflag [#allocation5], %s169
          %s171 = sand.u32 %s29, 1
          %s172 = smul.addr %s171, 128
          %s173 = scalar_lea.vmem [#allocation4], %s172
          %s174 = smul.u32 4, %s19
          %s176 = ssub.s32 2048, 2048
          %177 = vsyncadd %s170, %s176
          %s178 = smul.addr %s174, 4
          %s179 = smul.addr %s178, 128
          %s180 = scalar_lea.hbm %s0, %s179
          %s181 = sshll.u32 %s173, 4
          %s182 = int_to_ptr.vmem [resolvable:$true] %s181
          %187 = dma.hbm_to_vmem [thread:$0]  %s180, 2048, %s182, %s170, 512, 512, 32
        $region24: #{tpu_custom_call.1} parent=19 // pred_fallthru
          _
      $region20: #{tpu_custom_call.1} parent=5 // pred_fallthru
        _
      %p188 = scmp.le.s32.totalorder 1, %s19
      %p189 = scmp.lt.s32.totalorder %s19, 3
      %p190 = pnand %p188, %p189
      %p191 = pneg %p190
      // Predicated region
      $region25: #{tpu_custom_call.1} parent=5 // pred_check
        _
      $region26: #{tpu_custom_call.1} parent=5 // pred_check_branch
        %193 = sbr.rel (%p190) target = $region28
      $region27: #{tpu_custom_call.1} parent=5 // pred_region
        %s194 = ssub.s32 %s19, 1
        %s195 = sand.u32 %s32, 1
        %s196 = scalar_lea.sflag [#allocation5], %s195
        %s197 = sand.u32 %s32, 1
        %s198 = smul.addr %s197, 128
        %s199 = scalar_lea.vmem [#allocation4], %s198
        // Predicated region
        $region29: #{tpu_custom_call.1} parent=27 // pred_check
          %p200 = pneg %p45
        $region30: #{tpu_custom_call.1} parent=27 // pred_check_branch
          %202 = sbr.rel (%p200) target = $region32
        $region31: #{tpu_custom_call.1} parent=27 // pred_region
          %203 = dma.done %s196, 2048
        $region32: #{tpu_custom_call.1} parent=27 // pred_fallthru
          _
        // Predicated region
        $region33: #{tpu_custom_call.1} parent=27 // pred_check
          %p204 = pneg %p66
        $region34: #{tpu_custom_call.1} parent=27 // pred_check_branch
          %206 = sbr.rel (%p204) target = $region36
        $region35: #{tpu_custom_call.1} parent=27 // pred_region
          %207 = dma.done [#allocation8], 4096
        $region36: #{tpu_custom_call.1} parent=27 // pred_fallthru
          _
        %s208 = sand.u32 %s32, 1
        %s209 = scalar_lea.sflag [#allocation5], %s208
        %s210 = sand.u32 %s32, 1
        %s211 = smul.addr %s210, 128
        %s212 = scalar_lea.vmem [#allocation4], %s211
        %p213 = pneg %p45
        %p214 = pneg %p42
        %p215 = pneg %p66
        %p216 = pneg %p63
        %p217 = pneg %p92
        %p218 = pneg %p89
        %s219 = sand.u32 %s79, 1
        %s220 = scalar_lea.sflag [#allocation6], %s219
        %s221 = sand.u32 %s79, 1
        %s222 = smul.addr %s221, 32
        %s223 = scalar_lea.vmem [#allocation9], %s222
        %p224 = pneg %p113
        %p225 = pneg %p110
        %p226 = pneg %p134
        %p227 = pneg %p131
        %s228 = smul.u32 4, %s24
        %s229 = smul.u32 4, %s24
        %p231 = scmp.eq.s32.totalorder %s24, 0
        // Predicated region
        $region37: #{tpu_custom_call.1} parent=27 // pred_check
          %p232 = pneg %p231
        $region38: #{tpu_custom_call.1} parent=27 // pred_check_branch
          %234 = sbr.rel (%p232) target = $region40
        $region39: #{tpu_custom_call.1} parent=27 // pred_region
          %235 = vst [vmem:[#allocation2] sm:$0xff] 0.0
          %236 = vst [vmem:[#allocation3] sm:$0xff] 0.0
        $region40: #{tpu_custom_call.1} parent=27 // pred_fallthru
          _
        %v237 = vld [vmem:[#allocation7] sm:$0xff]
        %v238 = vld [vmem:[#allocation7 + $0x8] sm:$0xff]
        %v239 = vld [vmem:[#allocation7 + $0x10] sm:$0xff]
        %v240 = vld [vmem:[#allocation7 + $0x18] sm:$0xff]
        %v241 = vld [vmem:[#allocation7 + $0x20] sm:$0xff]
        %v242 = vld [vmem:[#allocation7 + $0x28] sm:$0xff]
        %v243 = vld [vmem:[#allocation7 + $0x30] sm:$0xff]
        %v244 = vld [vmem:[#allocation7 + $0x38] sm:$0xff]
        %v245 = vld [vmem:[#allocation7 + $0x40] sm:$0xff]
        %v246 = vld [vmem:[#allocation7 + $0x48] sm:$0xff]
        %v247 = vld [vmem:[#allocation7 + $0x50] sm:$0xff]
        %v248 = vld [vmem:[#allocation7 + $0x58] sm:$0xff]
        %v249 = vld [vmem:[#allocation7 + $0x60] sm:$0xff]
        %v250 = vld [vmem:[#allocation7 + $0x68] sm:$0xff]
        %v251 = vld [vmem:[#allocation7 + $0x70] sm:$0xff]
        %v252 = vld [vmem:[#allocation7 + $0x78] sm:$0xff]
        %v253 = vld [vmem:[#allocation7 + $0x80] sm:$0xff]
        %v254 = vld [vmem:[#allocation7 + $0x88] sm:$0xff]
        %v255 = vld [vmem:[#allocation7 + $0x90] sm:$0xff]
        %v256 = vld [vmem:[#allocation7 + $0x98] sm:$0xff]
        %v257 = vld [vmem:[#allocation7 + $0xa0] sm:$0xff]
        %v258 = vld [vmem:[#allocation7 + $0xa8] sm:$0xff]
        %v259 = vld [vmem:[#allocation7 + $0xb0] sm:$0xff]
        %v260 = vld [vmem:[#allocation7 + $0xb8] sm:$0xff]
        %v261 = vld [vmem:[#allocation7 + $0xc0] sm:$0xff]
        %v262 = vld [vmem:[#allocation7 + $0xc8] sm:$0xff]
        %v263 = vld [vmem:[#allocation7 + $0xd0] sm:$0xff]
        %v264 = vld [vmem:[#allocation7 + $0xd8] sm:$0xff]
        %v265 = vld [vmem:[#allocation7 + $0xe0] sm:$0xff]
        %v266 = vld [vmem:[#allocation7 + $0xe8] sm:$0xff]
        %v267 = vld [vmem:[#allocation7 + $0xf0] sm:$0xff]
        %v268 = vld [vmem:[#allocation7 + $0xf8] sm:$0xff]
        %v269 = vld [vmem:[%s199] sm:$0xff]
        %v270 = vld [vmem:[%s199 + $0x8] sm:$0xff]
        %v271 = vld [vmem:[%s199 + $0x10] sm:$0xff]
        %v272 = vld [vmem:[%s199 + $0x18] sm:$0xff]
        %v273 = vld [vmem:[#allocation2] sm:$0xff]
        %v274 = vld [vmem:[#allocation3] sm:$0xff]
        %v275 = vpack.c.bf16 %v273, %v273
        %v308 = vunpack.c.l.b16 %v237
        %v309 = vunpack.c.h.b16 %v237
        %v310 = vunpack.c.l.b16 %v238
        %v311 = vunpack.c.h.b16 %v238
        %v312 = vunpack.c.l.b16 %v239
        %v313 = vunpack.c.h.b16 %v239
        %v314 = vunpack.c.l.b16 %v240
        %v315 = vunpack.c.h.b16 %v240
        %v316 = vunpack.c.l.b16 %v241
        %v317 = vunpack.c.h.b16 %v241
        %v318 = vunpack.c.l.b16 %v242
        %v319 = vunpack.c.h.b16 %v242
        %v320 = vunpack.c.l.b16 %v243
        %v321 = vunpack.c.h.b16 %v243
        %v322 = vunpack.c.l.b16 %v244
        %v323 = vunpack.c.h.b16 %v244
        %v324 = vunpack.c.l.b16 %v245
        %v325 = vunpack.c.h.b16 %v245
        %v326 = vunpack.c.l.b16 %v246
        %v327 = vunpack.c.h.b16 %v246
        %v328 = vunpack.c.l.b16 %v247
        %v329 = vunpack.c.h.b16 %v247
        %v330 = vunpack.c.l.b16 %v248
        %v331 = vunpack.c.h.b16 %v248
        %v332 = vunpack.c.l.b16 %v249
        %v333 = vunpack.c.h.b16 %v249
        %v334 = vunpack.c.l.b16 %v250
        %v335 = vunpack.c.h.b16 %v250
        %v336 = vunpack.c.l.b16 %v251
        %v337 = vunpack.c.h.b16 %v251
        %v338 = vunpack.c.l.b16 %v252
        %v339 = vunpack.c.h.b16 %v252
        %v340 = vunpack.c.l.b16 %v253
        %v341 = vunpack.c.h.b16 %v253
        %v342 = vunpack.c.l.b16 %v254
        %v343 = vunpack.c.h.b16 %v254
        %v344 = vunpack.c.l.b16 %v255
        %v345 = vunpack.c.h.b16 %v255
        %v346 = vunpack.c.l.b16 %v256
        %v347 = vunpack.c.h.b16 %v256
        %v348 = vunpack.c.l.b16 %v257
        %v349 = vunpack.c.h.b16 %v257
        %v350 = vunpack.c.l.b16 %v258
        %v351 = vunpack.c.h.b16 %v258
        %v352 = vunpack.c.l.b16 %v259
        %v353 = vunpack.c.h.b16 %v259
        %v354 = vunpack.c.l.b16 %v260
        %v355 = vunpack.c.h.b16 %v260
        %v356 = vunpack.c.l.b16 %v261
        %v357 = vunpack.c.h.b16 %v261
        %v358 = vunpack.c.l.b16 %v262
        %v359 = vunpack.c.h.b16 %v262
        %v360 = vunpack.c.l.b16 %v263
        %v361 = vunpack.c.h.b16 %v263
        %v362 = vunpack.c.l.b16 %v264
        %v363 = vunpack.c.h.b16 %v264
        %v364 = vunpack.c.l.b16 %v265
        %v365 = vunpack.c.h.b16 %v265
        %v366 = vunpack.c.l.b16 %v266
        %v367 = vunpack.c.h.b16 %v266
        %v368 = vunpack.c.l.b16 %v267
        %v369 = vunpack.c.h.b16 %v267
        %v370 = vunpack.c.l.b16 %v268
        %v371 = vunpack.c.h.b16 %v268
        %v372 = vpack.c.b16 %v312, %v308
        %v373 = vpack.c.b16 %v313, %v309
        %v374 = vpack.c.b16 %v314, %v310
        %v375 = vpack.c.b16 %v315, %v311
        %v376 = vpack.c.b16 %v320, %v316
        %v377 = vpack.c.b16 %v321, %v317
        %v378 = vpack.c.b16 %v322, %v318
        %v379 = vpack.c.b16 %v323, %v319
        %v380 = vpack.c.b16 %v328, %v324
        %v381 = vpack.c.b16 %v329, %v325
        %v382 = vpack.c.b16 %v330, %v326
        %v383 = vpack.c.b16 %v331, %v327
        %v384 = vpack.c.b16 %v336, %v332
        %v385 = vpack.c.b16 %v337, %v333
        %v386 = vpack.c.b16 %v338, %v334
        %v387 = vpack.c.b16 %v339, %v335
        %v388 = vpack.c.b16 %v344, %v340
        %v389 = vpack.c.b16 %v345, %v341
        %v390 = vpack.c.b16 %v346, %v342
        %v391 = vpack.c.b16 %v347, %v343
        %v392 = vpack.c.b16 %v352, %v348
        %v393 = vpack.c.b16 %v353, %v349
        %v394 = vpack.c.b16 %v354, %v350
        %v395 = vpack.c.b16 %v355, %v351
        %v396 = vpack.c.b16 %v360, %v356
        %v397 = vpack.c.b16 %v361, %v357
        %v398 = vpack.c.b16 %v362, %v358
        %v399 = vpack.c.b16 %v363, %v359
        %v400 = vpack.c.b16 %v368, %v364
        %v401 = vpack.c.b16 %v369, %v365
        %v402 = vpack.c.b16 %v370, %v366
        %v403 = vpack.c.b16 %v371, %v367
        %436 = vmatprep.subr.bf16.mxu0 %v373
        %437 = vmatpush1.bf16.msra.mxu0 %v372
        %438 = vmatprep.subr.bf16.mxu0 %v377
        %439 = vmatpush1.bf16.msra.mxu0 %v376
        %440 = vmatprep.subr.bf16.mxu0 %v381
        %441 = vmatpush1.bf16.msra.mxu0 %v380
        %442 = vmatprep.subr.bf16.mxu0 %v385
        %443 = vmatpush1.bf16.msra.mxu0 %v384
        %444 = vmatprep.subr.bf16.mxu0 %v389
        %445 = vmatpush1.bf16.msra.mxu0 %v388
        %446 = vmatprep.subr.bf16.mxu0 %v393
        %447 = vmatpush1.bf16.msra.mxu0 %v392
        %448 = vmatprep.subr.bf16.mxu0 %v397
        %449 = vmatpush1.bf16.msra.mxu0 %v396
        %450 = vmatprep.subr.bf16.mxu0 %v401
        %451 = vmatpush1.bf16.msra.mxu0 %v400
        %452 = vmatprep.subr.bf16.mxu0 0
        %453 = vmatpush1.bf16.msra.mxu0 0
        %454 = vmatprep.subr.bf16.mxu0 0
        %455 = vmatpush1.bf16.msra.mxu0 0
        %456 = vmatprep.subr.bf16.mxu0 0
        %457 = vmatpush1.bf16.msra.mxu0 0
        %458 = vmatprep.subr.bf16.mxu0 0
        %459 = vmatpush1.bf16.msra.mxu0 0
        %460 = vmatprep.subr.bf16.mxu0 0
        %461 = vmatpush1.bf16.msra.mxu0 0
        %462 = vmatprep.subr.bf16.mxu0 0
        %463 = vmatpush1.bf16.msra.mxu0 0
        %464 = vmatprep.subr.bf16.mxu0 0
        %465 = vmatpush1.bf16.msra.mxu0 0
        %466 = vmatprep.subr.bf16.mxu0 0
        %467 = vmatpush1.bf16.msra.mxu0 0
        %468 = vmatprep.mubr.bf16.mxu0 0
        %469 = vmatmul.mubr.bf16.gmra.mrb[0].mxu0 %v275
        %v470 = vpop.f32.mrb[0].mxu0
        %v471 = vadd.f32 0.0, %v470
        %v472 = vpop.f32.mrb[0].mxu0
        %v473 = vadd.f32 0.0, %v472
        %v474 = vpop.f32.mrb[0].mxu0
        %v475 = vpop.f32.mrb[0].mxu0
        %476 = vdwg.mxu0
        %477 = vmatprep.subr.bf16.mxu0 %v375
        %478 = vmatpush1.bf16.msra.mxu0 %v374
        %479 = vmatprep.subr.bf16.mxu0 %v379
        %480 = vmatpush1.bf16.msra.mxu0 %v378
        %481 = vmatprep.subr.bf16.mxu0 %v383
        %482 = vmatpush1.bf16.msra.mxu0 %v382
        %483 = vmatprep.subr.bf16.mxu0 %v387
        %484 = vmatpush1.bf16.msra.mxu0 %v386
        %485 = vmatprep.subr.bf16.mxu0 %v391
        %486 = vmatpush1.bf16.msra.mxu0 %v390
        %487 = vmatprep.subr.bf16.mxu0 %v395
        %488 = vmatpush1.bf16.msra.mxu0 %v394
        %489 = vmatprep.subr.bf16.mxu0 %v399
        %490 = vmatpush1.bf16.msra.mxu0 %v398
        %491 = vmatprep.subr.bf16.mxu0 %v403
        %492 = vmatpush1.bf16.msra.mxu0 %v402
        %493 = vmatprep.subr.bf16.mxu0 0
        %494 = vmatpush1.bf16.msra.mxu0 0
        %495 = vmatprep.subr.bf16.mxu0 0
        %496 = vmatpush1.bf16.msra.mxu0 0
        %497 = vmatprep.subr.bf16.mxu0 0
        %498 = vmatpush1.bf16.msra.mxu0 0
        %499 = vmatprep.subr.bf16.mxu0 0
        %500 = vmatpush1.bf16.msra.mxu0 0
        %501 = vmatprep.subr.bf16.mxu0 0
        %502 = vmatpush1.bf16.msra.mxu0 0
        %503 = vmatprep.subr.bf16.mxu0 0
        %504 = vmatpush1.bf16.msra.mxu0 0
        %505 = vmatprep.subr.bf16.mxu0 0
        %506 = vmatpush1.bf16.msra.mxu0 0
        %507 = vmatprep.subr.bf16.mxu0 0
        %508 = vmatpush1.bf16.msra.mxu0 0
        %509 = vmatprep.mubr.bf16.mxu0 0
        %510 = vmatmul.mubr.bf16.gmra.mrb[0].mxu0 %v275
        %v511 = vpop.f32.mrb[0].mxu0
        %v512 = vadd.f32 0.0, %v511
        %v513 = vpop.f32.mrb[0].mxu0
        %v514 = vadd.f32 0.0, %v513
        %v515 = vpop.f32.mrb[0].mxu0
        %v516 = vpop.f32.mrb[0].mxu0
        %517 = vdwg.mxu0
        %v518 = vadd.f32 %v269, %v471
        %v519 = vadd.f32 %v270, %v473
        %v520 = vadd.f32 %v271, %v512
        %v521 = vadd.f32 %v272, %v514
        %v522 = vxor.u32 %v518, 2147483648
        %v523 = vmul.f32 %v522, 1.442695
        %v524 = vpow.pop %v523
        %v525 = vadd.f32 %v524, 1.0
        %v526 = vrcp.pop %v525
        %v527 = vmul.f32 1.0, %v526
        %v528 = vxor.u32 %v519, 2147483648
        %v529 = vmul.f32 %v528, 1.442695
        %v530 = vpow.pop %v529
        %v531 = vadd.f32 %v530, 1.0
        %v532 = vrcp.pop %v531
        %v533 = vmul.f32 1.0, %v532
        %v534 = vtanh.pop %v520
        %v535 = vxor.u32 %v521, 2147483648
        %v536 = vmul.f32 %v535, 1.442695
        %v537 = vpow.pop %v536
        %v538 = vadd.f32 %v537, 1.0
        %v539 = vrcp.pop %v538
        %v540 = vmul.f32 1.0, %v539
        %v541 = vmul.f32 %v533, %v274
        %v542 = vmul.f32 %v527, %v534
        %v543 = vadd.f32 %v541, %v542
        %v544 = vtanh.pop %v543
        %v545 = vmul.f32 %v540, %v544
        %546 = vst [vmem:[#allocation3] sm:$0xff] %v543
        %547 = vst [vmem:[#allocation2] sm:$0xff] %v545
        %548 = vst [vmem:[%s223] sm:$0xff] %v545
        %s549 = scalar_lea.vmem %s199, 32 [#allocation4]
        %v550 = vld [vmem:[%s549] sm:$0xff]
        %v551 = vld [vmem:[%s549 + $0x8] sm:$0xff]
        %v552 = vld [vmem:[%s549 + $0x10] sm:$0xff]
        %v553 = vld [vmem:[%s549 + $0x18] sm:$0xff]
        %v554 = vld [vmem:[#allocation2] sm:$0xff]
        %v555 = vld [vmem:[#allocation3] sm:$0xff]
        %v556 = vpack.c.bf16 %v554, %v554
        %557 = vmatprep.subr.bf16.mxu0 %v373
        %558 = vmatpush1.bf16.msra.mxu0 %v372
        %559 = vmatprep.subr.bf16.mxu0 %v377
        %560 = vmatpush1.bf16.msra.mxu0 %v376
        %561 = vmatprep.subr.bf16.mxu0 %v381
        %562 = vmatpush1.bf16.msra.mxu0 %v380
        %563 = vmatprep.subr.bf16.mxu0 %v385
        %564 = vmatpush1.bf16.msra.mxu0 %v384
        %565 = vmatprep.subr.bf16.mxu0 %v389
        %566 = vmatpush1.bf16.msra.mxu0 %v388
        %567 = vmatprep.subr.bf16.mxu0 %v393
        %568 = vmatpush1.bf16.msra.mxu0 %v392
        %569 = vmatprep.subr.bf16.mxu0 %v397
        %570 = vmatpush1.bf16.msra.mxu0 %v396
        %571 = vmatprep.subr.bf16.mxu0 %v401
        %572 = vmatpush1.bf16.msra.mxu0 %v400
        %573 = vmatprep.subr.bf16.mxu0 0
        %574 = vmatpush1.bf16.msra.mxu0 0
        %575 = vmatprep.subr.bf16.mxu0 0
        %576 = vmatpush1.bf16.msra.mxu0 0
        %577 = vmatprep.subr.bf16.mxu0 0
        %578 = vmatpush1.bf16.msra.mxu0 0
        %579 = vmatprep.subr.bf16.mxu0 0
        %580 = vmatpush1.bf16.msra.mxu0 0
        %581 = vmatprep.subr.bf16.mxu0 0
        %582 = vmatpush1.bf16.msra.mxu0 0
        %583 = vmatprep.subr.bf16.mxu0 0
        %584 = vmatpush1.bf16.msra.mxu0 0
        %585 = vmatprep.subr.bf16.mxu0 0
        %586 = vmatpush1.bf16.msra.mxu0 0
        %587 = vmatprep.subr.bf16.mxu0 0
        %588 = vmatpush1.bf16.msra.mxu0 0
        %589 = vmatprep.mubr.bf16.mxu0 0
        %590 = vmatmul.mubr.bf16.gmra.mrb[0].mxu0 %v556
        %v591 = vpop.f32.mrb[0].mxu0
        %v592 = vadd.f32 0.0, %v591
        %v593 = vpop.f32.mrb[0].mxu0
        %v594 = vadd.f32 0.0, %v593
        %v595 = vpop.f32.mrb[0].mxu0
        %v596 = vpop.f32.mrb[0].mxu0
        %597 = vdwg.mxu0
        %598 = vmatprep.subr.bf16.mxu0 %v375
        %599 = vmatpush1.bf16.msra.mxu0 %v374
        %600 = vmatprep.subr.bf16.mxu0 %v379
        %601 = vmatpush1.bf16.msra.mxu0 %v378
        %602 = vmatprep.subr.bf16.mxu0 %v383
        %603 = vmatpush1.bf16.msra.mxu0 %v382
        %604 = vmatprep.subr.bf16.mxu0 %v387
        %605 = vmatpush1.bf16.msra.mxu0 %v386
        %606 = vmatprep.subr.bf16.mxu0 %v391
        %607 = vmatpush1.bf16.msra.mxu0 %v390
        %608 = vmatprep.subr.bf16.mxu0 %v395
        %609 = vmatpush1.bf16.msra.mxu0 %v394
        %610 = vmatprep.subr.bf16.mxu0 %v399
        %611 = vmatpush1.bf16.msra.mxu0 %v398
        %612 = vmatprep.subr.bf16.mxu0 %v403
        %613 = vmatpush1.bf16.msra.mxu0 %v402
        %614 = vmatprep.subr.bf16.mxu0 0
        %615 = vmatpush1.bf16.msra.mxu0 0
        %616 = vmatprep.subr.bf16.mxu0 0
        %617 = vmatpush1.bf16.msra.mxu0 0
        %618 = vmatprep.subr.bf16.mxu0 0
        %619 = vmatpush1.bf16.msra.mxu0 0
        %620 = vmatprep.subr.bf16.mxu0 0
        %621 = vmatpush1.bf16.msra.mxu0 0
        %622 = vmatprep.subr.bf16.mxu0 0
        %623 = vmatpush1.bf16.msra.mxu0 0
        %624 = vmatprep.subr.bf16.mxu0 0
        %625 = vmatpush1.bf16.msra.mxu0 0
        %626 = vmatprep.subr.bf16.mxu0 0
        %627 = vmatpush1.bf16.msra.mxu0 0
        %628 = vmatprep.subr.bf16.mxu0 0
        %629 = vmatpush1.bf16.msra.mxu0 0
        %630 = vmatprep.mubr.bf16.mxu0 0
        %631 = vmatmul.mubr.bf16.gmra.mrb[0].mxu0 %v556
        %v632 = vpop.f32.mrb[0].mxu0
        %v633 = vadd.f32 0.0, %v632
        %v634 = vpop.f32.mrb[0].mxu0
        %v635 = vadd.f32 0.0, %v634
        %v636 = vpop.f32.mrb[0].mxu0
        %v637 = vpop.f32.mrb[0].mxu0
        %638 = vdwg.mxu0
        %v639 = vadd.f32 %v550, %v592
        %v640 = vadd.f32 %v551, %v594
        %v641 = vadd.f32 %v552, %v633
        %v642 = vadd.f32 %v553, %v635
        %v643 = vxor.u32 %v639, 2147483648
        %v644 = vmul.f32 %v643, 1.442695
        %v645 = vpow.pop %v644
        %v646 = vadd.f32 %v645, 1.0
        %v647 = vrcp.pop %v646
        %v648 = vmul.f32 1.0, %v647
        %v649 = vxor.u32 %v640, 2147483648
        %v650 = vmul.f32 %v649, 1.442695
        %v651 = vpow.pop %v650
        %v652 = vadd.f32 %v651, 1.0
        %v653 = vrcp.pop %v652
        %v654 = vmul.f32 1.0, %v653
        %v655 = vtanh.pop %v641
        %v656 = vxor.u32 %v642, 2147483648
        %v657 = vmul.f32 %v656, 1.442695
        %v658 = vpow.pop %v657
        %v659 = vadd.f32 %v658, 1.0
        %v660 = vrcp.pop %v659
        %v661 = vmul.f32 1.0, %v660
        %v662 = vmul.f32 %v654, %v555
        %v663 = vmul.f32 %v648, %v655
        %v664 = vadd.f32 %v662, %v663
        %v665 = vtanh.pop %v664
        %v666 = vmul.f32 %v661, %v665
        %667 = vst [vmem:[#allocation3] sm:$0xff] %v664
        %668 = vst [vmem:[#allocation2] sm:$0xff] %v666
        %s669 = scalar_lea.vmem %s223, 8 [#allocation9]
        %670 = vst [vmem:[%s669] sm:$0xff] %v666
        %s671 = scalar_lea.vmem %s199, 64 [#allocation4]
        %v672 = vld [vmem:[%s671] sm:$0xff]
        %v673 = vld [vmem:[%s671 + $0x8] sm:$0xff]
        %v674 = vld [vmem:[%s671 + $0x10] sm:$0xff]
        %v675 = vld [vmem:[%s671 + $0x18] sm:$0xff]
        %v676 = vld [vmem:[#allocation2] sm:$0xff]
        %v677 = vld [vmem:[#allocation3] sm:$0xff]
        %v678 = vpack.c.bf16 %v676, %v676
        %679 = vmatprep.subr.bf16.mxu0 %v373
        %680 = vmatpush1.bf16.msra.mxu0 %v372
        %681 = vmatprep.subr.bf16.mxu0 %v377
        %682 = vmatpush1.bf16.msra.mxu0 %v376
        %683 = vmatprep.subr.bf16.mxu0 %v381
        %684 = vmatpush1.bf16.msra.mxu0 %v380
        %685 = vmatprep.subr.bf16.mxu0 %v385
        %686 = vmatpush1.bf16.msra.mxu0 %v384
        %687 = vmatprep.subr.bf16.mxu0 %v389
        %688 = vmatpush1.bf16.msra.mxu0 %v388
        %689 = vmatprep.subr.bf16.mxu0 %v393
        %690 = vmatpush1.bf16.msra.mxu0 %v392
        %691 = vmatprep.subr.bf16.mxu0 %v397
        %692 = vmatpush1.bf16.msra.mxu0 %v396
        %693 = vmatprep.subr.bf16.mxu0 %v401
        %694 = vmatpush1.bf16.msra.mxu0 %v400
        %695 = vmatprep.subr.bf16.mxu0 0
        %696 = vmatpush1.bf16.msra.mxu0 0
        %697 = vmatprep.subr.bf16.mxu0 0
        %698 = vmatpush1.bf16.msra.mxu0 0
        %699 = vmatprep.subr.bf16.mxu0 0
        %700 = vmatpush1.bf16.msra.mxu0 0
        %701 = vmatprep.subr.bf16.mxu0 0
        %702 = vmatpush1.bf16.msra.mxu0 0
        %703 = vmatprep.subr.bf16.mxu0 0
        %704 = vmatpush1.bf16.msra.mxu0 0
        %705 = vmatprep.subr.bf16.mxu0 0
        %706 = vmatpush1.bf16.msra.mxu0 0
        %707 = vmatprep.subr.bf16.mxu0 0
        %708 = vmatpush1.bf16.msra.mxu0 0
        %709 = vmatprep.subr.bf16.mxu0 0
        %710 = vmatpush1.bf16.msra.mxu0 0
        %711 = vmatprep.mubr.bf16.mxu0 0
        %712 = vmatmul.mubr.bf16.gmra.mrb[0].mxu0 %v678
        %v713 = vpop.f32.mrb[0].mxu0
        %v714 = vadd.f32 0.0, %v713
        %v715 = vpop.f32.mrb[0].mxu0
        %v716 = vadd.f32 0.0, %v715
        %v717 = vpop.f32.mrb[0].mxu0
        %v718 = vpop.f32.mrb[0].mxu0
        %719 = vdwg.mxu0
        %720 = vmatprep.subr.bf16.mxu0 %v375
        %721 = vmatpush1.bf16.msra.mxu0 %v374
        %722 = vmatprep.subr.bf16.mxu0 %v379
        %723 = vmatpush1.bf16.msra.mxu0 %v378
        %724 = vmatprep.subr.bf16.mxu0 %v383
        %725 = vmatpush1.bf16.msra.mxu0 %v382
        %726 = vmatprep.subr.bf16.mxu0 %v387
        %727 = vmatpush1.bf16.msra.mxu0 %v386
        %728 = vmatprep.subr.bf16.mxu0 %v391
        %729 = vmatpush1.bf16.msra.mxu0 %v390
        %730 = vmatprep.subr.bf16.mxu0 %v395
        %731 = vmatpush1.bf16.msra.mxu0 %v394
        %732 = vmatprep.subr.bf16.mxu0 %v399
        %733 = vmatpush1.bf16.msra.mxu0 %v398
        %734 = vmatprep.subr.bf16.mxu0 %v403
        %735 = vmatpush1.bf16.msra.mxu0 %v402
        %736 = vmatprep.subr.bf16.mxu0 0
        %737 = vmatpush1.bf16.msra.mxu0 0
        %738 = vmatprep.subr.bf16.mxu0 0
        %739 = vmatpush1.bf16.msra.mxu0 0
        %740 = vmatprep.subr.bf16.mxu0 0
        %741 = vmatpush1.bf16.msra.mxu0 0
        %742 = vmatprep.subr.bf16.mxu0 0
        %743 = vmatpush1.bf16.msra.mxu0 0
        %744 = vmatprep.subr.bf16.mxu0 0
        %745 = vmatpush1.bf16.msra.mxu0 0
        %746 = vmatprep.subr.bf16.mxu0 0
        %747 = vmatpush1.bf16.msra.mxu0 0
        %748 = vmatprep.subr.bf16.mxu0 0
        %749 = vmatpush1.bf16.msra.mxu0 0
        %750 = vmatprep.subr.bf16.mxu0 0
        %751 = vmatpush1.bf16.msra.mxu0 0
        %752 = vmatprep.mubr.bf16.mxu0 0
        %753 = vmatmul.mubr.bf16.gmra.mrb[0].mxu0 %v678
        %v754 = vpop.f32.mrb[0].mxu0
        %v755 = vadd.f32 0.0, %v754
        %v756 = vpop.f32.mrb[0].mxu0
        %v757 = vadd.f32 0.0, %v756
        %v758 = vpop.f32.mrb[0].mxu0
        %v759 = vpop.f32.mrb[0].mxu0
        %760 = vdwg.mxu0
        %v761 = vadd.f32 %v672, %v714
        %v762 = vadd.f32 %v673, %v716
        %v763 = vadd.f32 %v674, %v755
        %v764 = vadd.f32 %v675, %v757
        %v765 = vxor.u32 %v761, 2147483648
        %v766 = vmul.f32 %v765, 1.442695
        %v767 = vpow.pop %v766
        %v768 = vadd.f32 %v767, 1.0
        %v769 = vrcp.pop %v768
        %v770 = vmul.f32 1.0, %v769
        %v771 = vxor.u32 %v762, 2147483648
        %v772 = vmul.f32 %v771, 1.442695
        %v773 = vpow.pop %v772
        %v774 = vadd.f32 %v773, 1.0
        %v775 = vrcp.pop %v774
        %v776 = vmul.f32 1.0, %v775
        %v777 = vtanh.pop %v763
        %v778 = vxor.u32 %v764, 2147483648
        %v779 = vmul.f32 %v778, 1.442695
        %v780 = vpow.pop %v779
        %v781 = vadd.f32 %v780, 1.0
        %v782 = vrcp.pop %v781
        %v783 = vmul.f32 1.0, %v782
        %v784 = vmul.f32 %v776, %v677
        %v785 = vmul.f32 %v770, %v777
        %v786 = vadd.f32 %v784, %v785
        %v787 = vtanh.pop %v786
        %v788 = vmul.f32 %v783, %v787
        %789 = vst [vmem:[#allocation3] sm:$0xff] %v786
        %790 = vst [vmem:[#allocation2] sm:$0xff] %v788
        %s791 = scalar_lea.vmem %s223, 16 [#allocation9]
        %792 = vst [vmem:[%s791] sm:$0xff] %v788
        %s793 = scalar_lea.vmem %s199, 96 [#allocation4]
        %v794 = vld [vmem:[%s793] sm:$0xff]
        %v795 = vld [vmem:[%s793 + $0x8] sm:$0xff]
        %v796 = vld [vmem:[%s793 + $0x10] sm:$0xff]
        %v797 = vld [vmem:[%s793 + $0x18] sm:$0xff]
        %v798 = vld [vmem:[#allocation2] sm:$0xff]
        %v799 = vld [vmem:[#allocation3] sm:$0xff]
        %v800 = vpack.c.bf16 %v798, %v798
        %801 = vmatprep.subr.bf16.mxu0 %v373
        %802 = vmatpush1.bf16.msra.mxu0 %v372
        %803 = vmatprep.subr.bf16.mxu0 %v377
        %804 = vmatpush1.bf16.msra.mxu0 %v376
        %805 = vmatprep.subr.bf16.mxu0 %v381
        %806 = vmatpush1.bf16.msra.mxu0 %v380
        %807 = vmatprep.subr.bf16.mxu0 %v385
        %808 = vmatpush1.bf16.msra.mxu0 %v384
        %809 = vmatprep.subr.bf16.mxu0 %v389
        %810 = vmatpush1.bf16.msra.mxu0 %v388
        %811 = vmatprep.subr.bf16.mxu0 %v393
        %812 = vmatpush1.bf16.msra.mxu0 %v392
        %813 = vmatprep.subr.bf16.mxu0 %v397
        %814 = vmatpush1.bf16.msra.mxu0 %v396
        %815 = vmatprep.subr.bf16.mxu0 %v401
        %816 = vmatpush1.bf16.msra.mxu0 %v400
        %817 = vmatprep.subr.bf16.mxu0 0
        %818 = vmatpush1.bf16.msra.mxu0 0
        %819 = vmatprep.subr.bf16.mxu0 0
        %820 = vmatpush1.bf16.msra.mxu0 0
        %821 = vmatprep.subr.bf16.mxu0 0
        %822 = vmatpush1.bf16.msra.mxu0 0
        %823 = vmatprep.subr.bf16.mxu0 0
        %824 = vmatpush1.bf16.msra.mxu0 0
        %825 = vmatprep.subr.bf16.mxu0 0
        %826 = vmatpush1.bf16.msra.mxu0 0
        %827 = vmatprep.subr.bf16.mxu0 0
        %828 = vmatpush1.bf16.msra.mxu0 0
        %829 = vmatprep.subr.bf16.mxu0 0
        %830 = vmatpush1.bf16.msra.mxu0 0
        %831 = vmatprep.subr.bf16.mxu0 0
        %832 = vmatpush1.bf16.msra.mxu0 0
        %833 = vmatprep.mubr.bf16.mxu0 0
        %834 = vmatmul.mubr.bf16.gmra.mrb[0].mxu0 %v800
        %v835 = vpop.f32.mrb[0].mxu0
        %v836 = vadd.f32 0.0, %v835
        %v837 = vpop.f32.mrb[0].mxu0
        %v838 = vadd.f32 0.0, %v837
        %v839 = vpop.f32.mrb[0].mxu0
        %v840 = vpop.f32.mrb[0].mxu0
        %841 = vdwg.mxu0
        %842 = vmatprep.subr.bf16.mxu0 %v375
        %843 = vmatpush1.bf16.msra.mxu0 %v374
        %844 = vmatprep.subr.bf16.mxu0 %v379
        %845 = vmatpush1.bf16.msra.mxu0 %v378
        %846 = vmatprep.subr.bf16.mxu0 %v383
        %847 = vmatpush1.bf16.msra.mxu0 %v382
        %848 = vmatprep.subr.bf16.mxu0 %v387
        %849 = vmatpush1.bf16.msra.mxu0 %v386
        %850 = vmatprep.subr.bf16.mxu0 %v391
        %851 = vmatpush1.bf16.msra.mxu0 %v390
        %852 = vmatprep.subr.bf16.mxu0 %v395
        %853 = vmatpush1.bf16.msra.mxu0 %v394
        %854 = vmatprep.subr.bf16.mxu0 %v399
        %855 = vmatpush1.bf16.msra.mxu0 %v398
        %856 = vmatprep.subr.bf16.mxu0 %v403
        %857 = vmatpush1.bf16.msra.mxu0 %v402
        %858 = vmatprep.subr.bf16.mxu0 0
        %859 = vmatpush1.bf16.msra.mxu0 0
        %860 = vmatprep.subr.bf16.mxu0 0
        %861 = vmatpush1.bf16.msra.mxu0 0
        %862 = vmatprep.subr.bf16.mxu0 0
        %863 = vmatpush1.bf16.msra.mxu0 0
        %864 = vmatprep.subr.bf16.mxu0 0
        %865 = vmatpush1.bf16.msra.mxu0 0
        %866 = vmatprep.subr.bf16.mxu0 0
        %867 = vmatpush1.bf16.msra.mxu0 0
        %868 = vmatprep.subr.bf16.mxu0 0
        %869 = vmatpush1.bf16.msra.mxu0 0
        %870 = vmatprep.subr.bf16.mxu0 0
        %871 = vmatpush1.bf16.msra.mxu0 0
        %872 = vmatprep.subr.bf16.mxu0 0
        %873 = vmatpush1.bf16.msra.mxu0 0
        %874 = vmatprep.mubr.bf16.mxu0 0
        %875 = vmatmul.mubr.bf16.gmra.mrb[0].mxu0 %v800
        %v876 = vpop.f32.mrb[0].mxu0
        %v877 = vadd.f32 0.0, %v876
        %v878 = vpop.f32.mrb[0].mxu0
        %v879 = vadd.f32 0.0, %v878
        %v880 = vpop.f32.mrb[0].mxu0
        %v881 = vpop.f32.mrb[0].mxu0
        %882 = vdwg.mxu0
        %v883 = vadd.f32 %v794, %v836
        %v884 = vadd.f32 %v795, %v838
        %v885 = vadd.f32 %v796, %v877
        %v886 = vadd.f32 %v797, %v879
        %v887 = vxor.u32 %v883, 2147483648
        %v888 = vmul.f32 %v887, 1.442695
        %v889 = vpow.pop %v888
        %v890 = vadd.f32 %v889, 1.0
        %v891 = vrcp.pop %v890
        %v892 = vmul.f32 1.0, %v891
        %v893 = vxor.u32 %v884, 2147483648
        %v894 = vmul.f32 %v893, 1.442695
        %v895 = vpow.pop %v894
        %v896 = vadd.f32 %v895, 1.0
        %v897 = vrcp.pop %v896
        %v898 = vmul.f32 1.0, %v897
        %v899 = vtanh.pop %v885
        %v900 = vxor.u32 %v886, 2147483648
        %v901 = vmul.f32 %v900, 1.442695
        %v902 = vpow.pop %v901
        %v903 = vadd.f32 %v902, 1.0
        %v904 = vrcp.pop %v903
        %v905 = vmul.f32 1.0, %v904
        %v906 = vmul.f32 %v898, %v799
        %v907 = vmul.f32 %v892, %v899
        %v908 = vadd.f32 %v906, %v907
        %v909 = vtanh.pop %v908
        %v910 = vmul.f32 %v905, %v909
        %911 = vst [vmem:[#allocation3] sm:$0xff] %v908
        %912 = vst [vmem:[#allocation2] sm:$0xff] %v910
        %s913 = scalar_lea.vmem %s223, 24 [#allocation9]
        %914 = vst [vmem:[%s913] sm:$0xff] %v910
        %p915 = scmp.eq.s32.totalorder %s24, 1
        // Predicated region
        $region41: #{tpu_custom_call.1} parent=27 // pred_check
          %p916 = pneg %p915
        $region42: #{tpu_custom_call.1} parent=27 // pred_check_branch
          %918 = sbr.rel (%p916) target = $region44
        $region43: #{tpu_custom_call.1} parent=27 // pred_region
          %v919 = vld [vmem:[#allocation2] sm:$0xff]
          %920 = vst [vmem:[#allocation10] sm:$0xff] %v919
          %v921 = vld [vmem:[#allocation3] sm:$0xff]
          %922 = vst [vmem:[#allocation12] sm:$0xff] %v921
        $region44: #{tpu_custom_call.1} parent=27 // pred_fallthru
          _
        %s923 = sand.u32 %s79, 1
        %s924 = scalar_lea.sflag [#allocation6], %s923
        %s925 = sand.u32 %s79, 1
        %s926 = smul.addr %s925, 32
        %s927 = scalar_lea.vmem [#allocation9], %s926
        // Predicated region
        $region45: #{tpu_custom_call.1} parent=27 // pred_check
          %p928 = pneg %p89
        $region46: #{tpu_custom_call.1} parent=27 // pred_check_branch
          %930 = sbr.rel (%p928) target = $region48
        $region47: #{tpu_custom_call.1} parent=27 // pred_region
          %s931 = smul.u32 4, %s24
          %s933 = ssub.s32 512, 512
          %934 = vsyncadd %s924, %s933
          %s935 = smul.addr %s931, 128
          %s936 = scalar_lea.hbm %s2, %s935
          %s937 = sshll.u32 %s927, 4
          %s938 = int_to_ptr.vmem [resolvable:$true] %s937
          %943 = dma.vmem_to_hbm [thread:$0]  %s938, 512, %s936, %s924, 128, 128, 8
        $region48: #{tpu_custom_call.1} parent=27 // pred_fallthru
          _
        // Predicated region
        $region49: #{tpu_custom_call.1} parent=27 // pred_check
          %p944 = pneg %p110
        $region50: #{tpu_custom_call.1} parent=27 // pred_check_branch
          %946 = sbr.rel (%p944) target = $region52
        $region51: #{tpu_custom_call.1} parent=27 // pred_region
          %s948 = ssub.s32 128, 128
          %949 = vsyncadd [#allocation11], %s948
          %s951 = sshll.u32 [#allocation10], 4
          %s952 = int_to_ptr.vmem [resolvable:$true] %s951
          %954 = dma.vmem_to_hbm [thread:$0]  %s952, 128, %s3, [#allocation11]
        $region52: #{tpu_custom_call.1} parent=27 // pred_fallthru
          _
        // Predicated region
        $region53: #{tpu_custom_call.1} parent=27 // pred_check
          %p955 = pneg %p131
        $region54: #{tpu_custom_call.1} parent=27 // pred_check_branch
          %957 = sbr.rel (%p955) target = $region56
        $region55: #{tpu_custom_call.1} parent=27 // pred_region
          %s959 = ssub.s32 128, 128
          %960 = vsyncadd [#allocation11], %s959
          %s962 = sshll.u32 [#allocation12], 4
          %s963 = int_to_ptr.vmem [resolvable:$true] %s962
          %965 = dma.vmem_to_hbm [thread:$0]  %s963, 128, %s4, [#allocation11]
        $region56: #{tpu_custom_call.1} parent=27 // pred_fallthru
          _
        // Predicated region
        $region57: #{tpu_custom_call.1} parent=27 // pred_check
          %p966 = pneg %p110
        $region58: #{tpu_custom_call.1} parent=27 // pred_check_branch
          %968 = sbr.rel (%p966) target = $region60
        $region59: #{tpu_custom_call.1} parent=27 // pred_region
          %969 = dma.done [#allocation11], 128
        $region60: #{tpu_custom_call.1} parent=27 // pred_fallthru
          _
        // Predicated region
        $region61: #{tpu_custom_call.1} parent=27 // pred_check
          %p970 = pneg %p131
        $region62: #{tpu_custom_call.1} parent=27 // pred_check_branch
          %972 = sbr.rel (%p970) target = $region64
        $region63: #{tpu_custom_call.1} parent=27 // pred_region
          %973 = dma.done [#allocation11], 128
        $region64: #{tpu_custom_call.1} parent=27 // pred_fallthru
          _
      $region28: #{tpu_custom_call.1} parent=5 // pred_fallthru
        _
      %p974 = scmp.le.s32.totalorder 2, %s19
      // Predicated region
      $region65: #{tpu_custom_call.1} parent=5 // pred_check
        %p975 = pneg %p974
      $region66: #{tpu_custom_call.1} parent=5 // pred_check_branch
        %977 = sbr.rel (%p975) target = $region68
      $region67: #{tpu_custom_call.1} parent=5 // pred_region
        %s978 = ssub.s32 %s19, 2
        // Predicated region
        $region69: #{tpu_custom_call.1} parent=67 // pred_check
          %p979 = pneg %p95
        $region70: #{tpu_custom_call.1} parent=67 // pred_check_branch
          %981 = sbr.rel (%p979) target = $region72
        $region71: #{tpu_custom_call.1} parent=67 // pred_region
          %s982 = sand.u32 %s80, 1
          %s983 = scalar_lea.sflag [#allocation6], %s982
          %s984 = sand.u32 %s80, 1
          %s985 = smul.addr %s984, 32
          %s986 = scalar_lea.vmem [#allocation9], %s985
          %987 = dma.done %s983, 512
        $region72: #{tpu_custom_call.1} parent=67 // pred_fallthru
          _
      $region68: #{tpu_custom_call.1} parent=5 // pred_fallthru
        _
    $region6: #{tpu_custom_call.1} parent=1 // loop_footer
      %s23 = sadd.s32 1, %s19
    $region7: #{tpu_custom_call.1} parent=1 // loop_footer_branch
      %18 = sbr.rel target = $region3
    $region8: #{tpu_custom_call.1} parent=1 // loop_exit
      _
    %988 = vsyncpa [#allocation5], 1
    %s989 = scalar_lea.sflag [#allocation5], 1
    %990 = vsyncpa %s989, 1
    %991 = vsyncpa [#allocation8], 1
    %992 = vsyncpa [#allocation6], 1
    %s993 = scalar_lea.sflag [#allocation6], 1
    %994 = vsyncpa %s993, 1
    %995 = vsyncpa [#allocation11], 1

</llo_original>
